<compile_context>
chip_gen: v5e
topology: v5e:2x2
jax: 0.10.0
libtpu: 0.0.40
codegen_flags: <defaults>
</compile_context>

<pallas_src>
import jax
import jax.numpy as jnp
from jax.experimental import pallas as pl
from jax.experimental.pallas import tpu as pltpu

LANE = 128


def _round_up(v, m):
    return ((v + m - 1) // m) * m


def mlp_kernel(x_ref, w1_ref, b1_ref, wh_ref, bh_ref, w2_ref, b2_ref, o_ref):
    # x / weights may be bf16 (MXU-native operands); accumulation and all
    # activation math (sigmoid / tanh / softmax) stay in f32.
    x = x_ref[...]

    # Biases read once per tile (single basic block -> no re-broadcast).
    b1 = b1_ref[...]
    bh = bh_ref[...]
    b2 = b2_ref[...]

    h1 = jnp.dot(x, w1_ref[...], preferred_element_type=jnp.float32) + b1
    h1 = jax.nn.sigmoid(h1)

    h2 = jnp.dot(h1.astype(wh_ref.dtype), wh_ref[...],
                 preferred_element_type=jnp.float32) + bh
    h2 = jnp.tanh(h2)

    logits = jnp.dot(h2.astype(w2_ref.dtype), w2_ref[...],
                     preferred_element_type=jnp.float32) + b2

    # Softmax over the (lane-padded) feature axis.  Padded columns carry a
    # -1e30 bias, so exp underflows to exactly 0 and they contribute nothing
    # to the denominator -> identical to softmax over the real columns.
    m = jnp.max(logits, axis=-1, keepdims=True)
    e = jnp.exp(logits - m)
    denom = jnp.sum(e, axis=-1, keepdims=True)
    # approx=True -> EUP vrcp slot, otherwise idle in this epilogue.
    o_ref[...] = (e * pl.reciprocal(denom, approx=True)).astype(o_ref.dtype)


def mlp_forward(x, w1, b1, wh, bh, w2, b2, *, batch_tile=256, use_bf16=True):
    B, in_sz = x.shape
    hid = w1.shape[1]
    hid2 = wh.shape[1]
    out_sz = w2.shape[1]

    # ---- Lane-dense output: pad output features to a multiple of 128. ----
    out_pad = _round_up(out_sz, LANE)
    if out_pad != out_sz:
        w2p = jnp.zeros((hid2, out_pad), w2.dtype).at[:, :out_sz].set(w2)
        b2p = jnp.full((1, out_pad), -1e30, jnp.float32).at[:, :out_sz].set(
            b2.astype(jnp.float32))
    else:
        w2p = w2
        b2p = b2.astype(jnp.float32)

    # ---- Operand dtype: bf16 into the MXU, biases/activations in f32. ----
    op_dtype = jnp.bfloat16 if use_bf16 else jnp.float32
    itemsize = jnp.dtype(op_dtype).itemsize
    cw1 = w1.astype(op_dtype)
    cwh = wh.astype(op_dtype)
    cw2 = w2p.astype(op_dtype)
    cb1 = b1.astype(jnp.float32)
    cbh = bh.astype(jnp.float32)

    # ---- Batch tile: primary tuning knob. Multiple of 8 (f32 sublane),
    # sized against a conservative VMEM budget (safe on v7x's smaller VMEM and
    # under v5e's default scoped limit), and capped at ceil(B/2) when possible
    # so the "parallel" axis gives both v7x TensorCores work. ----
    VMEM_BUDGET = 12 << 20
    per_row = (2 * in_sz * itemsize            # double-buffered x tile
               + 2 * out_pad * 4               # double-buffered output tile
               + 4 * (hid + hid2 + 2 * out_pad))  # f32 intermediates
    max_tile = max(8, (VMEM_BUDGET // per_row) // 8 * 8)
    batch_tile = _round_up(max(8, min(batch_tile, max_tile)), 8)
    cap = _round_up(B, 8) if B < 16 else _round_up(-(-B // 2), 8)
    batch_tile = min(batch_tile, cap)

    B_pad = _round_up(B, batch_tile)
    xin = x.astype(op_dtype)
    if B_pad != B:
        xin = jnp.pad(xin, ((0, B_pad - B), (0, 0)))

    grid = (B_pad // batch_tile,)
    full = lambda i: (0, 0)  # noqa: E731  weights/biases resident across steps

    flops = 2 * B_pad * (in_sz * hid + hid * hid2 + hid2 * out_pad)
    transcendentals = B_pad * (hid + hid2 + out_pad)  # sigmoid + tanh + exp
    bytes_accessed = (xin.size * itemsize
                      + (cw1.size + cwh.size + cw2.size) * itemsize
                      + (cb1.size + cbh.size + b2p.size) * 4
                      + B_pad * out_pad * 4)

    out = pl.pallas_call(
        mlp_kernel,
        out_shape=jax.ShapeDtypeStruct((B_pad, out_pad), jnp.float32),
        grid_spec=pltpu.PrefetchScalarGridSpec(
            num_scalar_prefetch=0,
            grid=grid,
            in_specs=[
                pl.BlockSpec((batch_tile, in_sz), lambda i: (i, 0)),
                pl.BlockSpec((in_sz, hid), full),
                pl.BlockSpec((1, hid), full),
                pl.BlockSpec((hid, hid2), full),
                pl.BlockSpec((1, hid2), full),
                pl.BlockSpec((hid2, out_pad), full),
                pl.BlockSpec((1, out_pad), full),
            ],
            out_specs=pl.BlockSpec((batch_tile, out_pad), lambda i: (i, 0)),
        ),
        compiler_params=pltpu.CompilerParams(
            dimension_semantics=("parallel",),
            # No-op on v6e/v7x (their default scoped limit), harmless raise over
            # v5e's 16 MiB default; well under v7x's 64 MiB physical VMEM.
            vmem_limit_bytes=32 * 1024 * 1024,
        ),
        cost_estimate=pl.CostEstimate(
            flops=flops,
            transcendentals=transcendentals,
            bytes_accessed=bytes_accessed,
        ),
    )(xin, cw1, cb1, cwh, cbh, cw2, b2p)

    # Strip batch padding and the lane-padded softmax columns (they are 0).
    return out[:B, :out_sz]


def reference_forward(x, w1, b1, wh, bh, w2, b2):
    h1 = jax.nn.sigmoid(x @ w1 + b1)
    h2 = jnp.tanh(h1 @ wh + bh)
    logits = h2 @ w2 + b2
    return jax.nn.softmax(logits, axis=1)


if __name__ == "__main__":
    # Sizes implied by the module: input_size, hidden_size, hidden_size//2, output_size.
    batch = 512          # big enough that the grid has 2 steps of 256 rows each
    input_size = 32
    hidden_size = 32
    hidden_half = hidden_size // 2
    output_size = 10

    key = jax.random.PRNGKey(0)
    kx, k1, kb1, kh, kbh, k2, kb2 = jax.random.split(key, 7)

    x = jax.random.normal(kx, (batch, input_size), dtype=jnp.float32)

    # Deterministic synthetic parameters, stored as (in, out) so the kernel
    # computes x @ W + b (transposed vs PyTorch's weight layout).
    w1 = jax.random.normal(k1, (input_size, hidden_size), dtype=jnp.float32) * 0.1
    b1 = jax.random.normal(kb1, (1, hidden_size), dtype=jnp.float32) * 0.1
    wh = jax.random.normal(kh, (hidden_size, hidden_half), dtype=jnp.float32) * 0.1
    bh = jax.random.normal(kbh, (1, hidden_half), dtype=jnp.float32) * 0.1
    w2 = jax.random.normal(k2, (hidden_half, output_size), dtype=jnp.float32) * 0.1
    b2 = jax.random.normal(kb2, (1, output_size), dtype=jnp.float32) * 0.1

    ref = reference_forward(x, w1, b1, wh, bh, w2, b2)

    # Exact-operand path (f32 into the MXU): validates tiling / padding logic.
    out_f32 = mlp_forward(x, w1, b1, wh, bh, w2, b2, use_bf16=False)
    out_f32 = jax.block_until_ready(out_f32)
    assert out_f32.shape == (batch, output_size)
    assert jnp.allclose(out_f32, ref, atol=5e-3, rtol=5e-3)  # approx vrcp tolerance

    # Default fast path: bf16 MXU operands, f32 accumulation/activations.
    out = mlp_forward(x, w1, b1, wh, bh, w2, b2)
    out = jax.block_until_ready(out)
    assert out.shape == (batch, output_size)
    assert jnp.allclose(out, ref, atol=2.5e-2, rtol=2.5e-2)
    # Rows of a softmax sum to 1 (up to approx-reciprocal error).
    assert jnp.allclose(jnp.sum(out, axis=1), jnp.ones((batch,)), atol=1e-2)

    print("KERNEL_OK")
</pallas_src>

<mosaic_0001>
module attributes {stable_mosaic.version = 11 : i64} {
  func.func @mlp_kernel(%arg0: i32, %arg1: memref<256x32xf32, #tpu.memory_space<vmem>>, %arg2: memref<32x32xf32, #tpu.memory_space<vmem>>, %arg3: memref<1x32xf32, #tpu.memory_space<vmem>>, %arg4: memref<32x16xf32, #tpu.memory_space<vmem>>, %arg5: memref<1x16xf32, #tpu.memory_space<vmem>>, %arg6: memref<16x128xf32, #tpu.memory_space<vmem>>, %arg7: memref<1x128xf32, #tpu.memory_space<vmem>>, %arg8: memref<256x128xf32, #tpu.memory_space<vmem>>) attributes {dimension_semantics = [#tpu.dimension_semantics<parallel>], iteration_bounds = array<i64: 2>, scalar_prefetch = 0 : i64, scratch_operands = 0 : i64, tpu.core_type = #tpu.core_type<tc>, window_params = [{transform_indices = @transform_0, window_bounds = array<i64: 256, 32>}, {pipeline_mode = #tpu.pipeline_mode<synchronous>, transform_indices = @transform_1, window_bounds = array<i64: 32, 32>}, {pipeline_mode = #tpu.pipeline_mode<synchronous>, transform_indices = @transform_2, window_bounds = array<i64: 1, 32>}, {pipeline_mode = #tpu.pipeline_mode<synchronous>, transform_indices = @transform_3, window_bounds = array<i64: 32, 16>}, {pipeline_mode = #tpu.pipeline_mode<synchronous>, transform_indices = @transform_4, window_bounds = array<i64: 1, 16>}, {pipeline_mode = #tpu.pipeline_mode<synchronous>, transform_indices = @transform_5, window_bounds = array<i64: 16, 128>}, {pipeline_mode = #tpu.pipeline_mode<synchronous>, transform_indices = @transform_6, window_bounds = array<i64: 1, 128>}, {transform_indices = @transform_7, window_bounds = array<i64: 256, 128>}]} {
    %c0 = arith.constant 0 : index
    %c0_0 = arith.constant 0 : index
    %0 = vector.load %arg1[%c0, %c0_0] : memref<256x32xf32, #tpu.memory_space<vmem>>, vector<256x32xf32>
    %c0_1 = arith.constant 0 : index
    %c0_2 = arith.constant 0 : index
    %1 = vector.load %arg3[%c0_1, %c0_2] : memref<1x32xf32, #tpu.memory_space<vmem>>, vector<1x32xf32>
    %c0_3 = arith.constant 0 : index
    %c0_4 = arith.constant 0 : index
    %2 = vector.load %arg5[%c0_3, %c0_4] : memref<1x16xf32, #tpu.memory_space<vmem>>, vector<1x16xf32>
    %c0_5 = arith.constant 0 : index
    %c0_6 = arith.constant 0 : index
    %3 = vector.load %arg7[%c0_5, %c0_6] : memref<1x128xf32, #tpu.memory_space<vmem>>, vector<1x128xf32>
    %c0_7 = arith.constant 0 : index
    %c0_8 = arith.constant 0 : index
    %4 = vector.load %arg2[%c0_7, %c0_8] : memref<32x32xf32, #tpu.memory_space<vmem>>, vector<32x32xf32>
    %cst = arith.constant dense<0.000000e+00> : vector<256x32xf32>
    %5 = tpu.matmul %0, %4, %cst {dimension_numbers = #tpu.dot_dimension_numbers<[1], [0], [0], [1], [0, 0, 1, 1], [], []>} : vector<256x32xf32>, vector<32x32xf32>, vector<256x32xf32> -> vector<256x32xf32>
    %6 = vector.broadcast %1 : vector<1x32xf32> to vector<256x32xf32>
    %7 = arith.addf %5, %6 : vector<256x32xf32>
    %8 = arith.negf %7 : vector<256x32xf32>
    %9 = math.exp %8 : vector<256x32xf32>
    %cst_9 = arith.constant 1.000000e+00 : f32
    %10 = vector.broadcast %cst_9 : f32 to vector<256x32xf32>
    %11 = arith.addf %10, %9 : vector<256x32xf32>
    %12 = arith.divf %10, %11 : vector<256x32xf32>
    %c0_10 = arith.constant 0 : index
    %c0_11 = arith.constant 0 : index
    %13 = vector.load %arg4[%c0_10, %c0_11] : memref<32x16xf32, #tpu.memory_space<vmem>>, vector<32x16xf32>
    %cst_12 = arith.constant dense<0.000000e+00> : vector<256x16xf32>
    %14 = tpu.matmul %12, %13, %cst_12 {dimension_numbers = #tpu.dot_dimension_numbers<[1], [0], [0], [1], [0, 0, 1, 1], [], []>} : vector<256x32xf32>, vector<32x16xf32>, vector<256x16xf32> -> vector<256x16xf32>
    %15 = vector.broadcast %2 : vector<1x16xf32> to vector<256x16xf32>
    %16 = arith.addf %14, %15 : vector<256x16xf32>
    %17 = math.tanh %16 : vector<256x16xf32>
    %c0_13 = arith.constant 0 : index
    %c0_14 = arith.constant 0 : index
    %18 = vector.load %arg6[%c0_13, %c0_14] : memref<16x128xf32, #tpu.memory_space<vmem>>, vector<16x128xf32>
    %cst_15 = arith.constant dense<0.000000e+00> : vector<256x128xf32>
    %19 = tpu.matmul %17, %18, %cst_15 {dimension_numbers = #tpu.dot_dimension_numbers<[1], [0], [0], [1], [0, 0, 1, 1], [], []>} : vector<256x16xf32>, vector<16x128xf32>, vector<256x128xf32> -> vector<256x128xf32>
    %20 = vector.broadcast %3 : vector<1x128xf32> to vector<256x128xf32>
    %21 = arith.addf %19, %20 : vector<256x128xf32>
    %cst_16 = arith.constant dense<0xFF800000> : vector<256xf32>
    %22 = vector.multi_reduction <maximumf>, %21, %cst_16 [1] : vector<256x128xf32> to vector<256xf32>
    %23 = vector.shape_cast %22 : vector<256xf32> to vector<256x1xf32>
    %24 = vector.broadcast %23 : vector<256x1xf32> to vector<256x128xf32>
    %25 = arith.subf %21, %24 : vector<256x128xf32>
    %26 = math.exp %25 : vector<256x128xf32>
    %cst_17 = arith.constant dense<0.000000e+00> : vector<256xf32>
    %27 = vector.multi_reduction <add>, %26, %cst_17 [1] : vector<256x128xf32> to vector<256xf32>
    %28 = vector.shape_cast %27 : vector<256xf32> to vector<256x1xf32>
    %29 = tpu.reciprocal %28 {approx = true} : vector<256x1xf32> -> vector<256x1xf32>
    %30 = vector.broadcast %29 : vector<256x1xf32> to vector<256x128xf32>
    %31 = arith.mulf %26, %30 : vector<256x128xf32>
    %c0_18 = arith.constant 0 : index
    %c0_19 = arith.constant 0 : index
    %32 = vector.load %arg8[%c0_18, %c0_19] : memref<256x128xf32, #tpu.memory_space<vmem>>, vector<256x128xf32>
    tpu.vector_store %arg8[%c0_18, %c0_19], %31 {strides = array<i32>} : memref<256x128xf32, #tpu.memory_space<vmem>>, vector<256x128xf32>,
    return
  }
  func.func @transform_0(%arg0: i32) -> (i32, i32) {
    %c0_i32 = arith.constant 0 : i32
    %c0_i32_0 = arith.constant 0 : i32
    return %arg0, %c0_i32 : i32, i32
  }
  func.func @transform_1(%arg0: i32) -> (i32, i32) {
    %c0_i32 = arith.constant 0 : i32
    %c0_i32_0 = arith.constant 0 : i32
    %c0_i32_1 = arith.constant 0 : i32
    return %c0_i32, %c0_i32_0 : i32, i32
  }
  func.func @transform_2(%arg0: i32) -> (i32, i32) {
    %c0_i32 = arith.constant 0 : i32
    %c0_i32_0 = arith.constant 0 : i32
    %c0_i32_1 = arith.constant 0 : i32
    return %c0_i32, %c0_i32_0 : i32, i32
  }
  func.func @transform_3(%arg0: i32) -> (i32, i32) {
    %c0_i32 = arith.constant 0 : i32
    %c0_i32_0 = arith.constant 0 : i32
    %c0_i32_1 = arith.constant 0 : i32
    return %c0_i32, %c0_i32_0 : i32, i32
  }
  func.func @transform_4(%arg0: i32) -> (i32, i32) {
    %c0_i32 = arith.constant 0 : i32
    %c0_i32_0 = arith.constant 0 : i32
    %c0_i32_1 = arith.constant 0 : i32
    return %c0_i32, %c0_i32_0 : i32, i32
  }
  func.func @transform_5(%arg0: i32) -> (i32, i32) {
    %c0_i32 = arith.constant 0 : i32
    %c0_i32_0 = arith.constant 0 : i32
    %c0_i32_1 = arith.constant 0 : i32
    return %c0_i32, %c0_i32_0 : i32, i32
  }
  func.func @transform_6(%arg0: i32) -> (i32, i32) {
    %c0_i32 = arith.constant 0 : i32
    %c0_i32_0 = arith.constant 0 : i32
    %c0_i32_1 = arith.constant 0 : i32
    return %c0_i32, %c0_i32_0 : i32, i32
  }
  func.func @transform_7(%arg0: i32) -> (i32, i32) {
    %c0_i32 = arith.constant 0 : i32
    %c0_i32_0 = arith.constant 0 : i32
    return %arg0, %c0_i32 : i32, i32
  }
}

</mosaic_0001>

<llo_original>
// kernel: tpu_custom_call.1
$region0: #{tpu_custom_call.1}
  #allocation0 [shape = 'u32[]', space=smem, size = 0x4, offset = 0x4, fixed_abs, tag = 'smem constant byte address 0x4 - core index']
  #allocation1 [shape = 'u32[72,128]{1,0:T(1,128)}', space=vmem, size = 0x9000, scoped, tag = 'internal scratch']
  %s0 = inlined_call_operand.vmem [shape: f32[512,32], index: 0, kind: input, shape index: {}]
  %s1 = inlined_call_operand.vmem [shape: f32[32,32], index: 1, kind: input, shape index: {}]
  %s2 = inlined_call_operand.vmem [shape: f32[1,32], index: 2, kind: input, shape index: {}]
  %s3 = inlined_call_operand.vmem [shape: f32[32,16], index: 3, kind: input, shape index: {}]
  %s4 = inlined_call_operand.vmem [shape: f32[1,16], index: 4, kind: input, shape index: {}]
  %s5 = inlined_call_operand.vmem [shape: f32[16,128], index: 5, kind: input, shape index: {}]
  %s6 = inlined_call_operand.vmem [shape: f32[1,128], index: 6, kind: input, shape index: {}]
  %s7 = inlined_call_operand.hbm [shape: f32[512,128], index: 7, kind: output, shape index: {}]
  %s8 = sld [smem:[#allocation0]]
  $region61: #{tpu_custom_call.1} parent=0
    _
  %s10 = ssub.s32 1, %s8
  %s11 = scalar_select 0, %s10, %s8
  $region1: #{tpu_custom_call.1} parent=0
    #allocation2 [shape = 'u8[262144]{0}', space=vmem, size = 0x40000, scoped, tag = 'output window, operand 0']
    #allocation3 [shape = 's32[2]{0}', space=sflag, size = 0x8, scoped, tag = 'scoped memory for tpu_custom_call.1']
    %12 = vsyncpa [#allocation3], 0
    %s13 = scalar_lea.sflag [#allocation3], 1
    %14 = vsyncpa %s13, 0
    loop: start=0, step=1, limit=4
    $region2: #{tpu_custom_call.1} parent=1 // loop_pre_header
      _
    $region3: #{tpu_custom_call.1} parent=1 // loop_header
      %s16 = sphi 0, %s20
      %p17 = scmp.ge.s32.totalorder %s16, 4
      %s26 = sphi 0, %s28
      %s29 = sphi 0, %s26
      %s30 = sphi 0, %s29
      %s46 = sphi 0, %s30
      %s50 = sphi 0, %s50
      %s52 = sphi 0, %s50
      %s53 = sphi 0, %s52
      %s67 = sphi 0, %s53
      %s71 = sphi 0, %s71
      %s73 = sphi 0, %s71
      %s74 = sphi 0, %s73
      %s88 = sphi 0, %s74
      %s92 = sphi 0, %s92
      %s94 = sphi 0, %s92
      %s95 = sphi 0, %s94
      %s109 = sphi 0, %s95
      %s113 = sphi 0, %s113
      %s115 = sphi 0, %s113
      %s116 = sphi 0, %s115
      %s130 = sphi 0, %s116
      %s134 = sphi 0, %s134
      %s136 = sphi 0, %s134
      %s137 = sphi 0, %s136
      %s151 = sphi 0, %s137
      %s155 = sphi 0, %s155
      %s157 = sphi 0, %s155
      %s158 = sphi 0, %s157
      %s172 = sphi 0, %s158
      %s178 = sphi 0, %s180
      %s181 = sphi 0, %s178
      %s182 = sphi 0, %s181
      %s198 = sphi 0, %s182
    $region4: #{tpu_custom_call.1} parent=1 // loop_header_branch
      %19 = sbr.rel (%p17) target = $region8
    $region5: #{tpu_custom_call.1} parent=1 // loop_body
      %s21 = ssub.s32 %s16, 1
      %s22 = ssub.s32 %s16, 2
      %s23 = sadd.s32 %s16, 1
      %s24 = ssub.s32 %s16, %s23
      %p25 = scmp.eq.s32.totalorder %s24, 0
      %s27 = sadd.s32 %s26, 1
      %s28 = scalar_select %p25, %s26, %s27
      %p31 = pneg %p25
      %p32 = scmp.eq.s32.totalorder %s16, 1
      %p33 = por %p31, %p32
      %p34 = scmp.ne.s32.totalorder %s26, %s29
      %p35 = scmp.eq.s32.totalorder %s16, 0
      %p36 = por %p34, %p35
      %p37 = scmp.ne.s32.totalorder %s26, %s29
      %p38 = scmp.eq.s32.totalorder %s21, 1
      %p39 = por %p37, %p38
      %p40 = scmp.ne.s32.totalorder %s29, %s30
      %p41 = scmp.eq.s32.totalorder %s21, 0
      %p42 = por %p40, %p41
      %p43 = scmp.ne.s32.totalorder %s29, %s30
      %p44 = scmp.eq.s32.totalorder %s22, 1
      %p45 = por %p43, %p44
      %p47 = scmp.ne.s32.totalorder %s30, %s46
      %p48 = scmp.eq.s32.totalorder %s22, 0
      %p49 = por %p47, %p48
      %s51 = sadd.s32 %s50, 1
      %p54 = scmp.eq.s32.totalorder %s16, 1
      %p55 = scmp.ne.s32.totalorder %s50, %s52
      %p56 = scmp.eq.s32.totalorder %s16, 0
      %p57 = por %p55, %p56
      %p58 = scmp.ne.s32.totalorder %s50, %s52
      %p59 = scmp.eq.s32.totalorder %s21, 1
      %p60 = por %p58, %p59
      %p61 = scmp.ne.s32.totalorder %s52, %s53
      %p62 = scmp.eq.s32.totalorder %s21, 0
      %p63 = por %p61, %p62
      %p64 = scmp.ne.s32.totalorder %s52, %s53
      %p65 = scmp.eq.s32.totalorder %s22, 1
      %p66 = por %p64, %p65
      %p68 = scmp.ne.s32.totalorder %s53, %s67
      %p69 = scmp.eq.s32.totalorder %s22, 0
      %p70 = por %p68, %p69
      %s72 = sadd.s32 %s71, 1
      %p75 = scmp.eq.s32.totalorder %s16, 1
      %p76 = scmp.ne.s32.totalorder %s71, %s73
      %p77 = scmp.eq.s32.totalorder %s16, 0
      %p78 = por %p76, %p77
      %p79 = scmp.ne.s32.totalorder %s71, %s73
      %p80 = scmp.eq.s32.totalorder %s21, 1
      %p81 = por %p79, %p80
      %p82 = scmp.ne.s32.totalorder %s73, %s74
      %p83 = scmp.eq.s32.totalorder %s21, 0
      %p84 = por %p82, %p83
      %p85 = scmp.ne.s32.totalorder %s73, %s74
      %p86 = scmp.eq.s32.totalorder %s22, 1
      %p87 = por %p85, %p86
      %p89 = scmp.ne.s32.totalorder %s74, %s88
      %p90 = scmp.eq.s32.totalorder %s22, 0
      %p91 = por %p89, %p90
      %s93 = sadd.s32 %s92, 1
      %p96 = scmp.eq.s32.totalorder %s16, 1
      %p97 = scmp.ne.s32.totalorder %s92, %s94
      %p98 = scmp.eq.s32.totalorder %s16, 0
      %p99 = por %p97, %p98
      %p100 = scmp.ne.s32.totalorder %s92, %s94
      %p101 = scmp.eq.s32.totalorder %s21, 1
      %p102 = por %p100, %p101
      %p103 = scmp.ne.s32.totalorder %s94, %s95
      %p104 = scmp.eq.s32.totalorder %s21, 0
      %p105 = por %p103, %p104
      %p106 = scmp.ne.s32.totalorder %s94, %s95
      %p107 = scmp.eq.s32.totalorder %s22, 1
      %p108 = por %p106, %p107
      %p110 = scmp.ne.s32.totalorder %s95, %s109
      %p111 = scmp.eq.s32.totalorder %s22, 0
      %p112 = por %p110, %p111
      %s114 = sadd.s32 %s113, 1
      %p117 = scmp.eq.s32.totalorder %s16, 1
      %p118 = scmp.ne.s32.totalorder %s113, %s115
      %p119 = scmp.eq.s32.totalorder %s16, 0
      %p120 = por %p118, %p119
      %p121 = scmp.ne.s32.totalorder %s113, %s115
      %p122 = scmp.eq.s32.totalorder %s21, 1
      %p123 = por %p121, %p122
      %p124 = scmp.ne.s32.totalorder %s115, %s116
      %p125 = scmp.eq.s32.totalorder %s21, 0
      %p126 = por %p124, %p125
      %p127 = scmp.ne.s32.totalorder %s115, %s116
      %p128 = scmp.eq.s32.totalorder %s22, 1
      %p129 = por %p127, %p128
      %p131 = scmp.ne.s32.totalorder %s116, %s130
      %p132 = scmp.eq.s32.totalorder %s22, 0
      %p133 = por %p131, %p132
      %s135 = sadd.s32 %s134, 1
      %p138 = scmp.eq.s32.totalorder %s16, 1
      %p139 = scmp.ne.s32.totalorder %s134, %s136
      %p140 = scmp.eq.s32.totalorder %s16, 0
      %p141 = por %p139, %p140
      %p142 = scmp.ne.s32.totalorder %s134, %s136
      %p143 = scmp.eq.s32.totalorder %s21, 1
      %p144 = por %p142, %p143
      %p145 = scmp.ne.s32.totalorder %s136, %s137
      %p146 = scmp.eq.s32.totalorder %s21, 0
      %p147 = por %p145, %p146
      %p148 = scmp.ne.s32.totalorder %s136, %s137
      %p149 = scmp.eq.s32.totalorder %s22, 1
      %p150 = por %p148, %p149
      %p152 = scmp.ne.s32.totalorder %s137, %s151
      %p153 = scmp.eq.s32.totalorder %s22, 0
      %p154 = por %p152, %p153
      %s156 = sadd.s32 %s155, 1
      %p159 = scmp.eq.s32.totalorder %s16, 1
      %p160 = scmp.ne.s32.totalorder %s155, %s157
      %p161 = scmp.eq.s32.totalorder %s16, 0
      %p162 = por %p160, %p161
      %p163 = scmp.ne.s32.totalorder %s155, %s157
      %p164 = scmp.eq.s32.totalorder %s21, 1
      %p165 = por %p163, %p164
      %p166 = scmp.ne.s32.totalorder %s157, %s158
      %p167 = scmp.eq.s32.totalorder %s21, 0
      %p168 = por %p166, %p167
      %p169 = scmp.ne.s32.totalorder %s157, %s158
      %p170 = scmp.eq.s32.totalorder %s22, 1
      %p171 = por %p169, %p170
      %p173 = scmp.ne.s32.totalorder %s158, %s172
      %p174 = scmp.eq.s32.totalorder %s22, 0
      %p175 = por %p173, %p174
      %s176 = ssub.s32 %s16, %s23
      %p177 = scmp.eq.s32.totalorder %s176, 0
      %s179 = sadd.s32 %s178, 1
      %s180 = scalar_select %p177, %s178, %s179
      %p183 = pneg %p177
      %p184 = scmp.eq.s32.totalorder %s16, 1
      %p185 = por %p183, %p184
      %p186 = scmp.ne.s32.totalorder %s178, %s181
      %p187 = scmp.eq.s32.totalorder %s16, 0
      %p188 = por %p186, %p187
      %p189 = scmp.ne.s32.totalorder %s178, %s181
      %p190 = scmp.eq.s32.totalorder %s21, 1
      %p191 = por %p189, %p190
      %p192 = scmp.ne.s32.totalorder %s181, %s182
      %p193 = scmp.eq.s32.totalorder %s21, 0
      %p194 = por %p192, %p193
      %p195 = scmp.ne.s32.totalorder %s181, %s182
      %p196 = scmp.eq.s32.totalorder %s22, 1
      %p197 = por %p195, %p196
      %p199 = scmp.ne.s32.totalorder %s182, %s198
      %p200 = scmp.eq.s32.totalorder %s22, 0
      %p201 = por %p199, %p200
      %p202 = scmp.le.s32.totalorder 1, %s16
      %p203 = scmp.lt.s32.totalorder %s16, 3
      %p204 = pnand %p202, %p203
      %p205 = pneg %p204
      // Predicated region
      $region9: #{tpu_custom_call.1} parent=5 // pred_check
        _
      $region10: #{tpu_custom_call.1} parent=5 // pred_check_branch
        %207 = sbr.rel (%p204) target = $region12
      $region11: #{tpu_custom_call.1} parent=5 // pred_region
        %s208 = ssub.s32 %s16, 1
        // Predicated region
        $region13: #{tpu_custom_call.1} parent=11 // pred_check
          %p209 = pneg %p63
        $region14: #{tpu_custom_call.1} parent=11 // pred_check_branch
          %211 = sbr.rel (%p209) target = $region16
        $region15: #{tpu_custom_call.1} parent=11 // pred_region
          _
        $region16: #{tpu_custom_call.1} parent=11 // pred_fallthru
          _
        // Predicated region
        $region17: #{tpu_custom_call.1} parent=11 // pred_check
          %p212 = pneg %p84
        $region18: #{tpu_custom_call.1} parent=11 // pred_check_branch
          %214 = sbr.rel (%p212) target = $region20
        $region19: #{tpu_custom_call.1} parent=11 // pred_region
          _
        $region20: #{tpu_custom_call.1} parent=11 // pred_fallthru
          _
        // Predicated region
        $region21: #{tpu_custom_call.1} parent=11 // pred_check
          %p215 = pneg %p105
        $region22: #{tpu_custom_call.1} parent=11 // pred_check_branch
          %217 = sbr.rel (%p215) target = $region24
        $region23: #{tpu_custom_call.1} parent=11 // pred_region
          _
        $region24: #{tpu_custom_call.1} parent=11 // pred_fallthru
          _
        // Predicated region
        $region25: #{tpu_custom_call.1} parent=11 // pred_check
          %p218 = pneg %p126
        $region26: #{tpu_custom_call.1} parent=11 // pred_check_branch
          %220 = sbr.rel (%p218) target = $region28
        $region27: #{tpu_custom_call.1} parent=11 // pred_region
          _
        $region28: #{tpu_custom_call.1} parent=11 // pred_fallthru
          _
        // Predicated region
        $region29: #{tpu_custom_call.1} parent=11 // pred_check
          %p221 = pneg %p147
        $region30: #{tpu_custom_call.1} parent=11 // pred_check_branch
          %223 = sbr.rel (%p221) target = $region32
        $region31: #{tpu_custom_call.1} parent=11 // pred_region
          _
        $region32: #{tpu_custom_call.1} parent=11 // pred_fallthru
          _
        // Predicated region
        $region33: #{tpu_custom_call.1} parent=11 // pred_check
          %p224 = pneg %p168
        $region34: #{tpu_custom_call.1} parent=11 // pred_check_branch
          %226 = sbr.rel (%p224) target = $region36
        $region35: #{tpu_custom_call.1} parent=11 // pred_region
          _
        $region36: #{tpu_custom_call.1} parent=11 // pred_fallthru
          _
      $region12: #{tpu_custom_call.1} parent=5 // pred_fallthru
        _
      %p227 = scmp.lt.s32.totalorder %s16, 2
      // Predicated region
      $region37: #{tpu_custom_call.1} parent=5 // pred_check
        %p228 = pneg %p227
      $region38: #{tpu_custom_call.1} parent=5 // pred_check_branch
        %230 = sbr.rel (%p228) target = $region40
      $region39: #{tpu_custom_call.1} parent=5 // pred_region
        // Predicated region
        $region41: #{tpu_custom_call.1} parent=39 // pred_check
          %p231 = pneg %p36
        $region42: #{tpu_custom_call.1} parent=39 // pred_check_branch
          %233 = sbr.rel (%p231) target = $region44
        $region43: #{tpu_custom_call.1} parent=39 // pred_region
          %s234 = smul.u32 32, %s16
          %p235 = scmp.lt.s32.totalorder %s234, 63
          %s236 = scalar_select %p235, %s234, 63
          %s237 = smul.addr %s236, 8
          %s238 = scalar_lea.vmem %s0, %s237
          %s239 = smul.u32 32, %s16
        $region44: #{tpu_custom_call.1} parent=39 // pred_fallthru
          _
      $region40: #{tpu_custom_call.1} parent=5 // pred_fallthru
        _
      %p240 = scmp.le.s32.totalorder 1, %s16
      %p241 = scmp.lt.s32.totalorder %s16, 3
      %p242 = pnand %p240, %p241
      %p243 = pneg %p242
      // Predicated region
      $region45: #{tpu_custom_call.1} parent=5 // pred_check
        _
      $region46: #{tpu_custom_call.1} parent=5 // pred_check_branch
        %245 = sbr.rel (%p242) target = $region48
      $region47: #{tpu_custom_call.1} parent=5 // pred_region
        %s246 = ssub.s32 %s16, 1
        %s247 = smul.u32 32, %s21
        %p248 = scmp.lt.s32.totalorder %s247, 63
        %s249 = scalar_select %p248, %s247, 63
        %s250 = smul.addr %s249, 8
        %s251 = scalar_lea.vmem %s0, %s250
        %p252 = pneg %p42
        %p253 = pneg %p39
        %p254 = pneg %p63
        %p255 = pneg %p60
        %p256 = pneg %p84
        %p257 = pneg %p81
        %p258 = pneg %p105
        %p259 = pneg %p102
        %p260 = pneg %p126
        %p261 = pneg %p123
        %p262 = pneg %p147
        %p263 = pneg %p144
        %p264 = pneg %p168
        %p265 = pneg %p165
        %p266 = pneg %p194
        %p267 = pneg %p191
        %s268 = sand.u32 %s181, 1
        %s269 = scalar_lea.sflag [#allocation3], %s268
        %s270 = sand.u32 %s181, 1
        %s271 = smul.addr %s270, 256
        %s272 = scalar_lea.vmem [#allocation2], %s271
        %s273 = smul.u32 32, %s21
        %p274 = scmp.lt.s32.totalorder %s273, 63
        %s275 = scalar_select %p274, %s273, 63
        %s276 = smul.addr %s275, 8
        %s277 = scalar_lea.vmem %s0, %s276
        %s278 = smul.u32 32, %s21
        %s279 = smul.u32 32, %s21
        %v280 = vld [vmem:[%s277] sm:$0xff]
        %v281 = vld [vmem:[%s277 + $0x8] sm:$0xff]
        %v282 = vld [vmem:[%s277 + $0x10] sm:$0xff]
        %v283 = vld [vmem:[%s277 + $0x18] sm:$0xff]
        %v284 = vld [vmem:[%s277 + $0x20] sm:$0xff]
        %v285 = vld [vmem:[%s277 + $0x28] sm:$0xff]
        %v286 = vld [vmem:[%s277 + $0x30] sm:$0xff]
        %v287 = vld [vmem:[%s277 + $0x38] sm:$0xff]
        %v288 = vld [vmem:[%s277 + $0x40] sm:$0xff]
        %v289 = vld [vmem:[%s277 + $0x48] sm:$0xff]
        %v290 = vld [vmem:[%s277 + $0x50] sm:$0xff]
        %v291 = vld [vmem:[%s277 + $0x58] sm:$0xff]
        %v292 = vld [vmem:[%s277 + $0x60] sm:$0xff]
        %v293 = vld [vmem:[%s277 + $0x68] sm:$0xff]
        %v294 = vld [vmem:[%s277 + $0x70] sm:$0xff]
        %v295 = vld [vmem:[%s277 + $0x78] sm:$0xff]
        %v296 = vld [vmem:[%s277 + $0x80] sm:$0xff]
        %v297 = vld [vmem:[%s277 + $0x88] sm:$0xff]
        %v298 = vld [vmem:[%s277 + $0x90] sm:$0xff]
        %v299 = vld [vmem:[%s277 + $0x98] sm:$0xff]
        %v300 = vld [vmem:[%s277 + $0xa0] sm:$0xff]
        %v301 = vld [vmem:[%s277 + $0xa8] sm:$0xff]
        %v302 = vld [vmem:[%s277 + $0xb0] sm:$0xff]
        %v303 = vld [vmem:[%s277 + $0xb8] sm:$0xff]
        %v304 = vld [vmem:[%s277 + $0xc0] sm:$0xff]
        %v305 = vld [vmem:[%s277 + $0xc8] sm:$0xff]
        %v306 = vld [vmem:[%s277 + $0xd0] sm:$0xff]
        %v307 = vld [vmem:[%s277 + $0xd8] sm:$0xff]
        %v308 = vld [vmem:[%s277 + $0xe0] sm:$0xff]
        %v309 = vld [vmem:[%s277 + $0xe8] sm:$0xff]
        %v310 = vld [vmem:[%s277 + $0xf0] sm:$0xff]
        %v311 = vld [vmem:[%s277 + $0xf8] sm:$0xff]
        %v312 = vld [vmem:[%s2] sm:$0x1]
        %v313 = vld [vmem:[%s4] sm:$0x1]
        %v314 = vld [vmem:[%s6] sm:$0x1]
        %v315 = vld [vmem:[%s1] sm:$0xff]
        %v316 = vld [vmem:[%s1 + $0x8] sm:$0xff]
        %v317 = vld [vmem:[%s1 + $0x10] sm:$0xff]
        %v318 = vld [vmem:[%s1 + $0x18] sm:$0xff]
        %v320 = vperm.slane %v312, 0
        %vm322 = vcmask 261120
        %v324 = vsel %vm322, %v280, 0
        %v327 = vsel %vm322, %v281, 0
        %v330 = vsel %vm322, %v282, 0
        %v333 = vsel %vm322, %v283, 0
        %v336 = vsel %vm322, %v284, 0
        %v339 = vsel %vm322, %v285, 0
        %v342 = vsel %vm322, %v286, 0
        %v345 = vsel %vm322, %v287, 0
        %v348 = vsel %vm322, %v288, 0
        %v351 = vsel %vm322, %v289, 0
        %v354 = vsel %vm322, %v290, 0
        %v357 = vsel %vm322, %v291, 0
        %v360 = vsel %vm322, %v292, 0
        %v363 = vsel %vm322, %v293, 0
        %v366 = vsel %vm322, %v294, 0
        %v369 = vsel %vm322, %v295, 0
        %v372 = vsel %vm322, %v296, 0
        %v375 = vsel %vm322, %v297, 0
        %v378 = vsel %vm322, %v298, 0
        %v381 = vsel %vm322, %v299, 0
        %v384 = vsel %vm322, %v300, 0
        %v387 = vsel %vm322, %v301, 0
        %v390 = vsel %vm322, %v302, 0
        %v393 = vsel %vm322, %v303, 0
        %v396 = vsel %vm322, %v304, 0
        %v399 = vsel %vm322, %v305, 0
        %v402 = vsel %vm322, %v306, 0
        %v405 = vsel %vm322, %v307, 0
        %v408 = vsel %vm322, %v308, 0
        %v411 = vsel %vm322, %v309, 0
        %v414 = vsel %vm322, %v310, 0
        %v417 = vsel %vm322, %v311, 0
        %419 = vmatpush.msra.mxu0 0.0
        %420 = vmatpush.msra.mxu0 0.0
        %421 = vmatpush.msra.mxu0 0.0
        %422 = vmatpush.msra.mxu0 0.0
        %423 = vmatpush.msra.mxu0 0.0
        %424 = vmatpush.msra.mxu0 0.0
        %425 = vmatpush.msra.mxu0 0.0
        %426 = vmatpush.msra.mxu0 0.0
        %427 = vmatpush.msra.mxu0 0.0
        %428 = vmatpush.msra.mxu0 0.0
        %429 = vmatpush.msra.mxu0 0.0
        %430 = vmatpush.msra.mxu0 0.0
        %431 = vmatpush.msra.mxu0 %v318
        %432 = vmatpush.msra.mxu0 %v317
        %433 = vmatpush.msra.mxu0 %v316
        %434 = vmatpush.msra.mxu0 %v315
        %435 = vmatmul.f32.gmra.mxu0 %v324
        %v436 = vpop.f32.mrf.mxu0
        %v437 = vadd.f32 %v320, %v436
        %438 = vmatmul.f32.gmra.mxu0 %v327
        %v439 = vpop.f32.mrf.mxu0
        %v440 = vadd.f32 %v320, %v439
        %441 = vmatmul.f32.gmra.mxu0 %v330
        %v442 = vpop.f32.mrf.mxu0
        %v443 = vadd.f32 %v320, %v442
        %444 = vmatmul.f32.gmra.mxu0 %v333
        %v445 = vpop.f32.mrf.mxu0
        %v446 = vadd.f32 %v320, %v445
        %447 = vmatmul.f32.gmra.mxu0 %v336
        %v448 = vpop.f32.mrf.mxu0
        %v449 = vadd.f32 %v320, %v448
        %450 = vmatmul.f32.gmra.mxu0 %v339
        %v451 = vpop.f32.mrf.mxu0
        %v452 = vadd.f32 %v320, %v451
        %453 = vmatmul.f32.gmra.mxu0 %v342
        %v454 = vpop.f32.mrf.mxu0
        %v455 = vadd.f32 %v320, %v454
        %456 = vmatmul.f32.gmra.mxu0 %v345
        %v457 = vpop.f32.mrf.mxu0
        %v458 = vadd.f32 %v320, %v457
        %459 = vmatmul.f32.gmra.mxu0 %v348
        %v460 = vpop.f32.mrf.mxu0
        %v461 = vadd.f32 %v320, %v460
        %462 = vmatmul.f32.gmra.mxu0 %v351
        %v463 = vpop.f32.mrf.mxu0
        %v464 = vadd.f32 %v320, %v463
        %465 = vmatmul.f32.gmra.mxu0 %v354
        %v466 = vpop.f32.mrf.mxu0
        %v467 = vadd.f32 %v320, %v466
        %468 = vmatmul.f32.gmra.mxu0 %v357
        %v469 = vpop.f32.mrf.mxu0
        %v470 = vadd.f32 %v320, %v469
        %471 = vmatmul.f32.gmra.mxu0 %v360
        %v472 = vpop.f32.mrf.mxu0
        %v473 = vadd.f32 %v320, %v472
        %474 = vmatmul.f32.gmra.mxu0 %v363
        %v475 = vpop.f32.mrf.mxu0
        %v476 = vadd.f32 %v320, %v475
        %477 = vmatmul.f32.gmra.mxu0 %v366
        %v478 = vpop.f32.mrf.mxu0
        %v479 = vadd.f32 %v320, %v478
        %480 = vmatmul.f32.gmra.mxu0 %v369
        %v481 = vpop.f32.mrf.mxu0
        %v482 = vadd.f32 %v320, %v481
        %483 = vmatmul.f32.gmra.mxu0 %v372
        %v484 = vpop.f32.mrf.mxu0
        %v485 = vadd.f32 %v320, %v484
        %486 = vmatmul.f32.gmra.mxu0 %v375
        %v487 = vpop.f32.mrf.mxu0
        %v488 = vadd.f32 %v320, %v487
        %489 = vmatmul.f32.gmra.mxu0 %v378
        %v490 = vpop.f32.mrf.mxu0
        %v491 = vadd.f32 %v320, %v490
        %492 = vmatmul.f32.gmra.mxu0 %v381
        %v493 = vpop.f32.mrf.mxu0
        %v494 = vadd.f32 %v320, %v493
        %495 = vmatmul.f32.gmra.mxu0 %v384
        %v496 = vpop.f32.mrf.mxu0
        %v497 = vadd.f32 %v320, %v496
        %498 = vmatmul.f32.gmra.mxu0 %v387
        %v499 = vpop.f32.mrf.mxu0
        %v500 = vadd.f32 %v320, %v499
        %501 = vmatmul.f32.gmra.mxu0 %v390
        %v502 = vpop.f32.mrf.mxu0
        %v503 = vadd.f32 %v320, %v502
        %504 = vmatmul.f32.gmra.mxu0 %v393
        %v505 = vpop.f32.mrf.mxu0
        %v506 = vadd.f32 %v320, %v505
        %507 = vmatmul.f32.gmra.mxu0 %v396
        %v508 = vpop.f32.mrf.mxu0
        %v509 = vadd.f32 %v320, %v508
        %510 = vmatmul.f32.gmra.mxu0 %v399
        %v511 = vpop.f32.mrf.mxu0
        %v512 = vadd.f32 %v320, %v511
        %513 = vmatmul.f32.gmra.mxu0 %v402
        %v514 = vpop.f32.mrf.mxu0
        %v515 = vadd.f32 %v320, %v514
        %516 = vmatmul.f32.gmra.mxu0 %v405
        %v517 = vpop.f32.mrf.mxu0
        %v518 = vadd.f32 %v320, %v517
        %519 = vmatmul.f32.gmra.mxu0 %v408
        %v520 = vpop.f32.mrf.mxu0
        %v521 = vadd.f32 %v320, %v520
        %522 = vmatmul.f32.gmra.mxu0 %v411
        %v523 = vpop.f32.mrf.mxu0
        %v524 = vadd.f32 %v320, %v523
        %525 = vmatmul.f32.gmra.mxu0 %v414
        %v526 = vpop.f32.mrf.mxu0
        %v527 = vadd.f32 %v320, %v526
        %528 = vmatmul.f32.gmra.mxu0 %v417
        %v529 = vpop.f32.mrf.mxu0
        %v530 = vadd.f32 %v320, %v529
        %531 = vdwg.mxu0
        %v532 = vxor.u32 %v437, 2147483648
        %v533 = vxor.u32 %v440, 2147483648
        %v534 = vxor.u32 %v443, 2147483648
        %v535 = vxor.u32 %v446, 2147483648
        %v536 = vxor.u32 %v449, 2147483648
        %v537 = vxor.u32 %v452, 2147483648
        %v538 = vxor.u32 %v455, 2147483648
        %v539 = vxor.u32 %v458, 2147483648
        %v540 = vxor.u32 %v461, 2147483648
        %v541 = vxor.u32 %v464, 2147483648
        %v542 = vxor.u32 %v467, 2147483648
        %v543 = vxor.u32 %v470, 2147483648
        %v544 = vxor.u32 %v473, 2147483648
        %v545 = vxor.u32 %v476, 2147483648
        %v546 = vxor.u32 %v479, 2147483648
        %v547 = vxor.u32 %v482, 2147483648
        %v548 = vxor.u32 %v485, 2147483648
        %v549 = vxor.u32 %v488, 2147483648
        %v550 = vxor.u32 %v491, 2147483648
        %v551 = vxor.u32 %v494, 2147483648
        %v552 = vxor.u32 %v497, 2147483648
        %v553 = vxor.u32 %v500, 2147483648
        %v554 = vxor.u32 %v503, 2147483648
        %v555 = vxor.u32 %v506, 2147483648
        %v556 = vxor.u32 %v509, 2147483648
        %v557 = vxor.u32 %v512, 2147483648
        %v558 = vxor.u32 %v515, 2147483648
        %v559 = vxor.u32 %v518, 2147483648
        %v560 = vxor.u32 %v521, 2147483648
        %v561 = vxor.u32 %v524, 2147483648
        %v562 = vxor.u32 %v527, 2147483648
        %v563 = vxor.u32 %v530, 2147483648
        %v564 = vmul.f32 %v532, 1.442695
        %v565 = vpow.pop %v564
        %v566 = vmul.f32 %v533, 1.442695
        %v567 = vpow.pop %v566
        %v568 = vmul.f32 %v534, 1.442695
        %v569 = vpow.pop %v568
        %v570 = vmul.f32 %v535, 1.442695
        %v571 = vpow.pop %v570
        %v572 = vmul.f32 %v536, 1.442695
        %v573 = vpow.pop %v572
        %v574 = vmul.f32 %v537, 1.442695
        %v575 = vpow.pop %v574
        %v576 = vmul.f32 %v538, 1.442695
        %v577 = vpow.pop %v576
        %v578 = vmul.f32 %v539, 1.442695
        %v579 = vpow.pop %v578
        %v580 = vmul.f32 %v540, 1.442695
        %v581 = vpow.pop %v580
        %v582 = vmul.f32 %v541, 1.442695
        %v583 = vpow.pop %v582
        %v584 = vmul.f32 %v542, 1.442695
        %v585 = vpow.pop %v584
        %v586 = vmul.f32 %v543, 1.442695
        %v587 = vpow.pop %v586
        %v588 = vmul.f32 %v544, 1.442695
        %v589 = vpow.pop %v588
        %v590 = vmul.f32 %v545, 1.442695
        %v591 = vpow.pop %v590
        %v592 = vmul.f32 %v546, 1.442695
        %v593 = vpow.pop %v592
        %v594 = vmul.f32 %v547, 1.442695
        %v595 = vpow.pop %v594
        %v596 = vmul.f32 %v548, 1.442695
        %v597 = vpow.pop %v596
        %v598 = vmul.f32 %v549, 1.442695
        %v599 = vpow.pop %v598
        %v600 = vmul.f32 %v550, 1.442695
        %v601 = vpow.pop %v600
        %v602 = vmul.f32 %v551, 1.442695
        %v603 = vpow.pop %v602
        %v604 = vmul.f32 %v552, 1.442695
        %v605 = vpow.pop %v604
        %v606 = vmul.f32 %v553, 1.442695
        %v607 = vpow.pop %v606
        %v608 = vmul.f32 %v554, 1.442695
        %v609 = vpow.pop %v608
        %v610 = vmul.f32 %v555, 1.442695
        %v611 = vpow.pop %v610
        %v612 = vmul.f32 %v556, 1.442695
        %v613 = vpow.pop %v612
        %v614 = vmul.f32 %v557, 1.442695
        %v615 = vpow.pop %v614
        %v616 = vmul.f32 %v558, 1.442695
        %v617 = vpow.pop %v616
        %v618 = vmul.f32 %v559, 1.442695
        %v619 = vpow.pop %v618
        %v620 = vmul.f32 %v560, 1.442695
        %v621 = vpow.pop %v620
        %v622 = vmul.f32 %v561, 1.442695
        %v623 = vpow.pop %v622
        %v624 = vmul.f32 %v562, 1.442695
        %v625 = vpow.pop %v624
        %v626 = vmul.f32 %v563, 1.442695
        %v627 = vpow.pop %v626
        %v628 = vadd.f32 %v565, 1.0
        %v629 = vadd.f32 %v567, 1.0
        %v630 = vadd.f32 %v569, 1.0
        %v631 = vadd.f32 %v571, 1.0
        %v632 = vadd.f32 %v573, 1.0
        %v633 = vadd.f32 %v575, 1.0
        %v634 = vadd.f32 %v577, 1.0
        %v635 = vadd.f32 %v579, 1.0
        %v636 = vadd.f32 %v581, 1.0
        %v637 = vadd.f32 %v583, 1.0
        %v638 = vadd.f32 %v585, 1.0
        %v639 = vadd.f32 %v587, 1.0
        %v640 = vadd.f32 %v589, 1.0
        %v641 = vadd.f32 %v591, 1.0
        %v642 = vadd.f32 %v593, 1.0
        %v643 = vadd.f32 %v595, 1.0
        %v644 = vadd.f32 %v597, 1.0
        %v645 = vadd.f32 %v599, 1.0
        %v646 = vadd.f32 %v601, 1.0
        %v647 = vadd.f32 %v603, 1.0
        %v648 = vadd.f32 %v605, 1.0
        %v649 = vadd.f32 %v607, 1.0
        %v650 = vadd.f32 %v609, 1.0
        %v651 = vadd.f32 %v611, 1.0
        %v652 = vadd.f32 %v613, 1.0
        %v653 = vadd.f32 %v615, 1.0
        %v654 = vadd.f32 %v617, 1.0
        %v655 = vadd.f32 %v619, 1.0
        %v656 = vadd.f32 %v621, 1.0
        %v657 = vadd.f32 %v623, 1.0
        %v658 = vadd.f32 %v625, 1.0
        %v659 = vadd.f32 %v627, 1.0
        %v660 = vrcp.pop %v628
        %v661 = vmul.f32 %v628, %v660
        %v662 = vsub.f32 1.0, %v661
        %v663 = vmul.f32 %v660, %v662
        %v664 = vadd.f32 %v660, %v663
        %vm665 = vweird.f32 %v628
        %vm666 = vweird.f32 %v660
        %vm667 = vmor %vm665, %vm666
        %v668 = vsel %vm667, %v660, %v664
        %v669 = vand.u32 2147483647, %v628
        %vm670 = vcmp.eq.f32.partialorder %v669, 8.507059e+37
        %v671 = vand.u32 %v628, 2147483648
        %v672 = vor.u32 1.1754944e-38, %v671
        %v673 = vsel %vm670, %v672, %v668
        %v674 = vmul.f32 1.0, %v673
        %v675 = vrcp.pop %v629
        %v676 = vmul.f32 %v629, %v675
        %v677 = vsub.f32 1.0, %v676
        %v678 = vmul.f32 %v675, %v677
        %v679 = vadd.f32 %v675, %v678
        %vm680 = vweird.f32 %v629
        %vm681 = vweird.f32 %v675
        %vm682 = vmor %vm680, %vm681
        %v683 = vsel %vm682, %v675, %v679
        %v684 = vand.u32 2147483647, %v629
        %vm685 = vcmp.eq.f32.partialorder %v684, 8.507059e+37
        %v686 = vand.u32 %v629, 2147483648
        %v687 = vor.u32 1.1754944e-38, %v686
        %v688 = vsel %vm685, %v687, %v683
        %v689 = vmul.f32 1.0, %v688
        %v690 = vrcp.pop %v630
        %v691 = vmul.f32 %v630, %v690
        %v692 = vsub.f32 1.0, %v691
        %v693 = vmul.f32 %v690, %v692
        %v694 = vadd.f32 %v690, %v693
        %vm695 = vweird.f32 %v630
        %vm696 = vweird.f32 %v690
        %vm697 = vmor %vm695, %vm696
        %v698 = vsel %vm697, %v690, %v694
        %v699 = vand.u32 2147483647, %v630
        %vm700 = vcmp.eq.f32.partialorder %v699, 8.507059e+37
        %v701 = vand.u32 %v630, 2147483648
        %v702 = vor.u32 1.1754944e-38, %v701
        %v703 = vsel %vm700, %v702, %v698
        %v704 = vmul.f32 1.0, %v703
        %v705 = vrcp.pop %v631
        %v706 = vmul.f32 %v631, %v705
        %v707 = vsub.f32 1.0, %v706
        %v708 = vmul.f32 %v705, %v707
        %v709 = vadd.f32 %v705, %v708
        %vm710 = vweird.f32 %v631
        %vm711 = vweird.f32 %v705
        %vm712 = vmor %vm710, %vm711
        %v713 = vsel %vm712, %v705, %v709
        %v714 = vand.u32 2147483647, %v631
        %vm715 = vcmp.eq.f32.partialorder %v714, 8.507059e+37
        %v716 = vand.u32 %v631, 2147483648
        %v717 = vor.u32 1.1754944e-38, %v716
        %v718 = vsel %vm715, %v717, %v713
        %v719 = vmul.f32 1.0, %v718
        %v720 = vrcp.pop %v632
        %v721 = vmul.f32 %v632, %v720
        %v722 = vsub.f32 1.0, %v721
        %v723 = vmul.f32 %v720, %v722
        %v724 = vadd.f32 %v720, %v723
        %vm725 = vweird.f32 %v632
        %vm726 = vweird.f32 %v720
        %vm727 = vmor %vm725, %vm726
        %v728 = vsel %vm727, %v720, %v724
        %v729 = vand.u32 2147483647, %v632
        %vm730 = vcmp.eq.f32.partialorder %v729, 8.507059e+37
        %v731 = vand.u32 %v632, 2147483648
        %v732 = vor.u32 1.1754944e-38, %v731
        %v733 = vsel %vm730, %v732, %v728
        %v734 = vmul.f32 1.0, %v733
        %v735 = vrcp.pop %v633
        %v736 = vmul.f32 %v633, %v735
        %v737 = vsub.f32 1.0, %v736
        %v738 = vmul.f32 %v735, %v737
        %v739 = vadd.f32 %v735, %v738
        %vm740 = vweird.f32 %v633
        %vm741 = vweird.f32 %v735
        %vm742 = vmor %vm740, %vm741
        %v743 = vsel %vm742, %v735, %v739
        %v744 = vand.u32 2147483647, %v633
        %vm745 = vcmp.eq.f32.partialorder %v744, 8.507059e+37
        %v746 = vand.u32 %v633, 2147483648
        %v747 = vor.u32 1.1754944e-38, %v746
        %v748 = vsel %vm745, %v747, %v743
        %v749 = vmul.f32 1.0, %v748
        %v750 = vrcp.pop %v634
        %v751 = vmul.f32 %v634, %v750
        %v752 = vsub.f32 1.0, %v751
        %v753 = vmul.f32 %v750, %v752
        %v754 = vadd.f32 %v750, %v753
        %vm755 = vweird.f32 %v634
        %vm756 = vweird.f32 %v750
        %vm757 = vmor %vm755, %vm756
        %v758 = vsel %vm757, %v750, %v754
        %v759 = vand.u32 2147483647, %v634
        %vm760 = vcmp.eq.f32.partialorder %v759, 8.507059e+37
        %v761 = vand.u32 %v634, 2147483648
        %v762 = vor.u32 1.1754944e-38, %v761
        %v763 = vsel %vm760, %v762, %v758
        %v764 = vmul.f32 1.0, %v763
        %v765 = vrcp.pop %v635
        %v766 = vmul.f32 %v635, %v765
        %v767 = vsub.f32 1.0, %v766
        %v768 = vmul.f32 %v765, %v767
        %v769 = vadd.f32 %v765, %v768
        %vm770 = vweird.f32 %v635
        %vm771 = vweird.f32 %v765
        %vm772 = vmor %vm770, %vm771
        %v773 = vsel %vm772, %v765, %v769
        %v774 = vand.u32 2147483647, %v635
        %vm775 = vcmp.eq.f32.partialorder %v774, 8.507059e+37
        %v776 = vand.u32 %v635, 2147483648
        %v777 = vor.u32 1.1754944e-38, %v776
        %v778 = vsel %vm775, %v777, %v773
        %v779 = vmul.f32 1.0, %v778
        %v780 = vrcp.pop %v636
        %v781 = vmul.f32 %v636, %v780
        %v782 = vsub.f32 1.0, %v781
        %v783 = vmul.f32 %v780, %v782
        %v784 = vadd.f32 %v780, %v783
        %vm785 = vweird.f32 %v636
        %vm786 = vweird.f32 %v780
        %vm787 = vmor %vm785, %vm786
        %v788 = vsel %vm787, %v780, %v784
        %v789 = vand.u32 2147483647, %v636
        %vm790 = vcmp.eq.f32.partialorder %v789, 8.507059e+37
        %v791 = vand.u32 %v636, 2147483648
        %v792 = vor.u32 1.1754944e-38, %v791
        %v793 = vsel %vm790, %v792, %v788
        %v794 = vmul.f32 1.0, %v793
        %v795 = vrcp.pop %v637
        %v796 = vmul.f32 %v637, %v795
        %v797 = vsub.f32 1.0, %v796
        %v798 = vmul.f32 %v795, %v797
        %v799 = vadd.f32 %v795, %v798
        %vm800 = vweird.f32 %v637
        %vm801 = vweird.f32 %v795
        %vm802 = vmor %vm800, %vm801
        %v803 = vsel %vm802, %v795, %v799
        %v804 = vand.u32 2147483647, %v637
        %vm805 = vcmp.eq.f32.partialorder %v804, 8.507059e+37
        %v806 = vand.u32 %v637, 2147483648
        %v807 = vor.u32 1.1754944e-38, %v806
        %v808 = vsel %vm805, %v807, %v803
        %v809 = vmul.f32 1.0, %v808
        %v810 = vrcp.pop %v638
        %v811 = vmul.f32 %v638, %v810
        %v812 = vsub.f32 1.0, %v811
        %v813 = vmul.f32 %v810, %v812
        %v814 = vadd.f32 %v810, %v813
        %vm815 = vweird.f32 %v638
        %vm816 = vweird.f32 %v810
        %vm817 = vmor %vm815, %vm816
        %v818 = vsel %vm817, %v810, %v814
        %v819 = vand.u32 2147483647, %v638
        %vm820 = vcmp.eq.f32.partialorder %v819, 8.507059e+37
        %v821 = vand.u32 %v638, 2147483648
        %v822 = vor.u32 1.1754944e-38, %v821
        %v823 = vsel %vm820, %v822, %v818
        %v824 = vmul.f32 1.0, %v823
        %v825 = vrcp.pop %v639
        %v826 = vmul.f32 %v639, %v825
        %v827 = vsub.f32 1.0, %v826
        %v828 = vmul.f32 %v825, %v827
        %v829 = vadd.f32 %v825, %v828
        %vm830 = vweird.f32 %v639
        %vm831 = vweird.f32 %v825
        %vm832 = vmor %vm830, %vm831
        %v833 = vsel %vm832, %v825, %v829
        %v834 = vand.u32 2147483647, %v639
        %vm835 = vcmp.eq.f32.partialorder %v834, 8.507059e+37
        %v836 = vand.u32 %v639, 2147483648
        %v837 = vor.u32 1.1754944e-38, %v836
        %v838 = vsel %vm835, %v837, %v833
        %v839 = vmul.f32 1.0, %v838
        %v840 = vrcp.pop %v640
        %v841 = vmul.f32 %v640, %v840
        %v842 = vsub.f32 1.0, %v841
        %v843 = vmul.f32 %v840, %v842
        %v844 = vadd.f32 %v840, %v843
        %vm845 = vweird.f32 %v640
        %vm846 = vweird.f32 %v840
        %vm847 = vmor %vm845, %vm846
        %v848 = vsel %vm847, %v840, %v844
        %v849 = vand.u32 2147483647, %v640
        %vm850 = vcmp.eq.f32.partialorder %v849, 8.507059e+37
        %v851 = vand.u32 %v640, 2147483648
        %v852 = vor.u32 1.1754944e-38, %v851
        %v853 = vsel %vm850, %v852, %v848
        %v854 = vmul.f32 1.0, %v853
        %v855 = vrcp.pop %v641
        %v856 = vmul.f32 %v641, %v855
        %v857 = vsub.f32 1.0, %v856
        %v858 = vmul.f32 %v855, %v857
        %v859 = vadd.f32 %v855, %v858
        %vm860 = vweird.f32 %v641
        %vm861 = vweird.f32 %v855
        %vm862 = vmor %vm860, %vm861
        %v863 = vsel %vm862, %v855, %v859
        %v864 = vand.u32 2147483647, %v641
        %vm865 = vcmp.eq.f32.partialorder %v864, 8.507059e+37
        %v866 = vand.u32 %v641, 2147483648
        %v867 = vor.u32 1.1754944e-38, %v866
        %v868 = vsel %vm865, %v867, %v863
        %v869 = vmul.f32 1.0, %v868
        %v870 = vrcp.pop %v642
        %v871 = vmul.f32 %v642, %v870
        %v872 = vsub.f32 1.0, %v871
        %v873 = vmul.f32 %v870, %v872
        %v874 = vadd.f32 %v870, %v873
        %vm875 = vweird.f32 %v642
        %vm876 = vweird.f32 %v870
        %vm877 = vmor %vm875, %vm876
        %v878 = vsel %vm877, %v870, %v874
        %v879 = vand.u32 2147483647, %v642
        %vm880 = vcmp.eq.f32.partialorder %v879, 8.507059e+37
        %v881 = vand.u32 %v642, 2147483648
        %v882 = vor.u32 1.1754944e-38, %v881
        %v883 = vsel %vm880, %v882, %v878
        %v884 = vmul.f32 1.0, %v883
        %v885 = vrcp.pop %v643
        %v886 = vmul.f32 %v643, %v885
        %v887 = vsub.f32 1.0, %v886
        %v888 = vmul.f32 %v885, %v887
        %v889 = vadd.f32 %v885, %v888
        %vm890 = vweird.f32 %v643
        %vm891 = vweird.f32 %v885
        %vm892 = vmor %vm890, %vm891
        %v893 = vsel %vm892, %v885, %v889
        %v894 = vand.u32 2147483647, %v643
        %vm895 = vcmp.eq.f32.partialorder %v894, 8.507059e+37
        %v896 = vand.u32 %v643, 2147483648
        %v897 = vor.u32 1.1754944e-38, %v896
        %v898 = vsel %vm895, %v897, %v893
        %v899 = vmul.f32 1.0, %v898
        %v900 = vrcp.pop %v644
        %v901 = vmul.f32 %v644, %v900
        %v902 = vsub.f32 1.0, %v901
        %v903 = vmul.f32 %v900, %v902
        %v904 = vadd.f32 %v900, %v903
        %vm905 = vweird.f32 %v644
        %vm906 = vweird.f32 %v900
        %vm907 = vmor %vm905, %vm906
        %v908 = vsel %vm907, %v900, %v904
        %v909 = vand.u32 2147483647, %v644
        %vm910 = vcmp.eq.f32.partialorder %v909, 8.507059e+37
        %v911 = vand.u32 %v644, 2147483648
        %v912 = vor.u32 1.1754944e-38, %v911
        %v913 = vsel %vm910, %v912, %v908
        %v914 = vmul.f32 1.0, %v913
        %v915 = vrcp.pop %v645
        %v916 = vmul.f32 %v645, %v915
        %v917 = vsub.f32 1.0, %v916
        %v918 = vmul.f32 %v915, %v917
        %v919 = vadd.f32 %v915, %v918
        %vm920 = vweird.f32 %v645
        %vm921 = vweird.f32 %v915
        %vm922 = vmor %vm920, %vm921
        %v923 = vsel %vm922, %v915, %v919
        %v924 = vand.u32 2147483647, %v645
        %vm925 = vcmp.eq.f32.partialorder %v924, 8.507059e+37
        %v926 = vand.u32 %v645, 2147483648
        %v927 = vor.u32 1.1754944e-38, %v926
        %v928 = vsel %vm925, %v927, %v923
        %v929 = vmul.f32 1.0, %v928
        %v930 = vrcp.pop %v646
        %v931 = vmul.f32 %v646, %v930
        %v932 = vsub.f32 1.0, %v931
        %v933 = vmul.f32 %v930, %v932
        %v934 = vadd.f32 %v930, %v933
        %vm935 = vweird.f32 %v646
        %vm936 = vweird.f32 %v930
        %vm937 = vmor %vm935, %vm936
        %v938 = vsel %vm937, %v930, %v934
        %v939 = vand.u32 2147483647, %v646
        %vm940 = vcmp.eq.f32.partialorder %v939, 8.507059e+37
        %v941 = vand.u32 %v646, 2147483648
        %v942 = vor.u32 1.1754944e-38, %v941
        %v943 = vsel %vm940, %v942, %v938
        %v944 = vmul.f32 1.0, %v943
        %v945 = vrcp.pop %v647
        %v946 = vmul.f32 %v647, %v945
        %v947 = vsub.f32 1.0, %v946
        %v948 = vmul.f32 %v945, %v947
        %v949 = vadd.f32 %v945, %v948
        %vm950 = vweird.f32 %v647
        %vm951 = vweird.f32 %v945
        %vm952 = vmor %vm950, %vm951
        %v953 = vsel %vm952, %v945, %v949
        %v954 = vand.u32 2147483647, %v647
        %vm955 = vcmp.eq.f32.partialorder %v954, 8.507059e+37
        %v956 = vand.u32 %v647, 2147483648
        %v957 = vor.u32 1.1754944e-38, %v956
        %v958 = vsel %vm955, %v957, %v953
        %v959 = vmul.f32 1.0, %v958
        %v960 = vrcp.pop %v648
        %v961 = vmul.f32 %v648, %v960
        %v962 = vsub.f32 1.0, %v961
        %v963 = vmul.f32 %v960, %v962
        %v964 = vadd.f32 %v960, %v963
        %vm965 = vweird.f32 %v648
        %vm966 = vweird.f32 %v960
        %vm967 = vmor %vm965, %vm966
        %v968 = vsel %vm967, %v960, %v964
        %v969 = vand.u32 2147483647, %v648
        %vm970 = vcmp.eq.f32.partialorder %v969, 8.507059e+37
        %v971 = vand.u32 %v648, 2147483648
        %v972 = vor.u32 1.1754944e-38, %v971
        %v973 = vsel %vm970, %v972, %v968
        %v974 = vmul.f32 1.0, %v973
        %v975 = vrcp.pop %v649
        %v976 = vmul.f32 %v649, %v975
        %v977 = vsub.f32 1.0, %v976
        %v978 = vmul.f32 %v975, %v977
        %v979 = vadd.f32 %v975, %v978
        %vm980 = vweird.f32 %v649
        %vm981 = vweird.f32 %v975
        %vm982 = vmor %vm980, %vm981
        %v983 = vsel %vm982, %v975, %v979
        %v984 = vand.u32 2147483647, %v649
        %vm985 = vcmp.eq.f32.partialorder %v984, 8.507059e+37
        %v986 = vand.u32 %v649, 2147483648
        %v987 = vor.u32 1.1754944e-38, %v986
        %v988 = vsel %vm985, %v987, %v983
        %v989 = vmul.f32 1.0, %v988
        %v990 = vrcp.pop %v650
        %v991 = vmul.f32 %v650, %v990
        %v992 = vsub.f32 1.0, %v991
        %v993 = vmul.f32 %v990, %v992
        %v994 = vadd.f32 %v990, %v993
        %vm995 = vweird.f32 %v650
        %vm996 = vweird.f32 %v990
        %vm997 = vmor %vm995, %vm996
        %v998 = vsel %vm997, %v990, %v994
        %v999 = vand.u32 2147483647, %v650
        %vm1000 = vcmp.eq.f32.partialorder %v999, 8.507059e+37
        %v1001 = vand.u32 %v650, 2147483648
        %v1002 = vor.u32 1.1754944e-38, %v1001
        %v1003 = vsel %vm1000, %v1002, %v998
        %v1004 = vmul.f32 1.0, %v1003
        %v1005 = vrcp.pop %v651
        %v1006 = vmul.f32 %v651, %v1005
        %v1007 = vsub.f32 1.0, %v1006
        %v1008 = vmul.f32 %v1005, %v1007
        %v1009 = vadd.f32 %v1005, %v1008
        %vm1010 = vweird.f32 %v651
        %vm1011 = vweird.f32 %v1005
        %vm1012 = vmor %vm1010, %vm1011
        %v1013 = vsel %vm1012, %v1005, %v1009
        %v1014 = vand.u32 2147483647, %v651
        %vm1015 = vcmp.eq.f32.partialorder %v1014, 8.507059e+37
        %v1016 = vand.u32 %v651, 2147483648
        %v1017 = vor.u32 1.1754944e-38, %v1016
        %v1018 = vsel %vm1015, %v1017, %v1013
        %v1019 = vmul.f32 1.0, %v1018
        %v1020 = vrcp.pop %v652
        %v1021 = vmul.f32 %v652, %v1020
        %v1022 = vsub.f32 1.0, %v1021
        %v1023 = vmul.f32 %v1020, %v1022
        %v1024 = vadd.f32 %v1020, %v1023
        %vm1025 = vweird.f32 %v652
        %vm1026 = vweird.f32 %v1020
        %vm1027 = vmor %vm1025, %vm1026
        %v1028 = vsel %vm1027, %v1020, %v1024
        %v1029 = vand.u32 2147483647, %v652
        %vm1030 = vcmp.eq.f32.partialorder %v1029, 8.507059e+37
        %v1031 = vand.u32 %v652, 2147483648
        %v1032 = vor.u32 1.1754944e-38, %v1031
        %v1033 = vsel %vm1030, %v1032, %v1028
        %v1034 = vmul.f32 1.0, %v1033
        %v1035 = vrcp.pop %v653
        %v1036 = vmul.f32 %v653, %v1035
        %v1037 = vsub.f32 1.0, %v1036
        %v1038 = vmul.f32 %v1035, %v1037
        %v1039 = vadd.f32 %v1035, %v1038
        %vm1040 = vweird.f32 %v653
        %vm1041 = vweird.f32 %v1035
        %vm1042 = vmor %vm1040, %vm1041
        %v1043 = vsel %vm1042, %v1035, %v1039
        %v1044 = vand.u32 2147483647, %v653
        %vm1045 = vcmp.eq.f32.partialorder %v1044, 8.507059e+37
        %v1046 = vand.u32 %v653, 2147483648
        %v1047 = vor.u32 1.1754944e-38, %v1046
        %v1048 = vsel %vm1045, %v1047, %v1043
        %v1049 = vmul.f32 1.0, %v1048
        %v1050 = vrcp.pop %v654
        %v1051 = vmul.f32 %v654, %v1050
        %v1052 = vsub.f32 1.0, %v1051
        %v1053 = vmul.f32 %v1050, %v1052
        %v1054 = vadd.f32 %v1050, %v1053
        %vm1055 = vweird.f32 %v654
        %vm1056 = vweird.f32 %v1050
        %vm1057 = vmor %vm1055, %vm1056
        %v1058 = vsel %vm1057, %v1050, %v1054
        %v1059 = vand.u32 2147483647, %v654
        %vm1060 = vcmp.eq.f32.partialorder %v1059, 8.507059e+37
        %v1061 = vand.u32 %v654, 2147483648
        %v1062 = vor.u32 1.1754944e-38, %v1061
        %v1063 = vsel %vm1060, %v1062, %v1058
        %v1064 = vmul.f32 1.0, %v1063
        %v1065 = vrcp.pop %v655
        %v1066 = vmul.f32 %v655, %v1065
        %v1067 = vsub.f32 1.0, %v1066
        %v1068 = vmul.f32 %v1065, %v1067
        %v1069 = vadd.f32 %v1065, %v1068
        %vm1070 = vweird.f32 %v655
        %vm1071 = vweird.f32 %v1065
        %vm1072 = vmor %vm1070, %vm1071
        %v1073 = vsel %vm1072, %v1065, %v1069
        %v1074 = vand.u32 2147483647, %v655
        %vm1075 = vcmp.eq.f32.partialorder %v1074, 8.507059e+37
        %v1076 = vand.u32 %v655, 2147483648
        %v1077 = vor.u32 1.1754944e-38, %v1076
        %v1078 = vsel %vm1075, %v1077, %v1073
        %v1079 = vmul.f32 1.0, %v1078
        %v1080 = vrcp.pop %v656
        %v1081 = vmul.f32 %v656, %v1080
        %v1082 = vsub.f32 1.0, %v1081
        %v1083 = vmul.f32 %v1080, %v1082
        %v1084 = vadd.f32 %v1080, %v1083
        %vm1085 = vweird.f32 %v656
        %vm1086 = vweird.f32 %v1080
        %vm1087 = vmor %vm1085, %vm1086
        %v1088 = vsel %vm1087, %v1080, %v1084
        %v1089 = vand.u32 2147483647, %v656
        %vm1090 = vcmp.eq.f32.partialorder %v1089, 8.507059e+37
        %v1091 = vand.u32 %v656, 2147483648
        %v1092 = vor.u32 1.1754944e-38, %v1091
        %v1093 = vsel %vm1090, %v1092, %v1088
        %v1094 = vmul.f32 1.0, %v1093
        %v1095 = vrcp.pop %v657
        %v1096 = vmul.f32 %v657, %v1095
        %v1097 = vsub.f32 1.0, %v1096
        %v1098 = vmul.f32 %v1095, %v1097
        %v1099 = vadd.f32 %v1095, %v1098
        %vm1100 = vweird.f32 %v657
        %vm1101 = vweird.f32 %v1095
        %vm1102 = vmor %vm1100, %vm1101
        %v1103 = vsel %vm1102, %v1095, %v1099
        %v1104 = vand.u32 2147483647, %v657
        %vm1105 = vcmp.eq.f32.partialorder %v1104, 8.507059e+37
        %v1106 = vand.u32 %v657, 2147483648
        %v1107 = vor.u32 1.1754944e-38, %v1106
        %v1108 = vsel %vm1105, %v1107, %v1103
        %v1109 = vmul.f32 1.0, %v1108
        %v1110 = vrcp.pop %v658
        %v1111 = vmul.f32 %v658, %v1110
        %v1112 = vsub.f32 1.0, %v1111
        %v1113 = vmul.f32 %v1110, %v1112
        %v1114 = vadd.f32 %v1110, %v1113
        %vm1115 = vweird.f32 %v658
        %vm1116 = vweird.f32 %v1110
        %vm1117 = vmor %vm1115, %vm1116
        %v1118 = vsel %vm1117, %v1110, %v1114
        %v1119 = vand.u32 2147483647, %v658
        %vm1120 = vcmp.eq.f32.partialorder %v1119, 8.507059e+37
        %v1121 = vand.u32 %v658, 2147483648
        %v1122 = vor.u32 1.1754944e-38, %v1121
        %v1123 = vsel %vm1120, %v1122, %v1118
        %v1124 = vmul.f32 1.0, %v1123
        %v1125 = vrcp.pop %v659
        %v1126 = vmul.f32 %v659, %v1125
        %v1127 = vsub.f32 1.0, %v1126
        %v1128 = vmul.f32 %v1125, %v1127
        %v1129 = vadd.f32 %v1125, %v1128
        %vm1130 = vweird.f32 %v659
        %vm1131 = vweird.f32 %v1125
        %vm1132 = vmor %vm1130, %vm1131
        %v1133 = vsel %vm1132, %v1125, %v1129
        %v1134 = vand.u32 2147483647, %v659
        %vm1135 = vcmp.eq.f32.partialorder %v1134, 8.507059e+37
        %v1136 = vand.u32 %v659, 2147483648
        %v1137 = vor.u32 1.1754944e-38, %v1136
        %v1138 = vsel %vm1135, %v1137, %v1133
        %v1139 = vmul.f32 1.0, %v1138
        %v1140 = vld [vmem:[%s3] sm:$0xff]
        %v1141 = vld [vmem:[%s3 + $0x8] sm:$0xff]
        %v1142 = vld [vmem:[%s3 + $0x10] sm:$0xff]
        %v1143 = vld [vmem:[%s3 + $0x18] sm:$0xff]
        %v1145 = vperm.slane %v313, 0
        %v1148 = vsel %vm322, %v674, 0
        %v1151 = vsel %vm322, %v689, 0
        %v1154 = vsel %vm322, %v704, 0
        %v1157 = vsel %vm322, %v719, 0
        %v1160 = vsel %vm322, %v734, 0
        %v1163 = vsel %vm322, %v749, 0
        %v1166 = vsel %vm322, %v764, 0
        %v1169 = vsel %vm322, %v779, 0
        %v1172 = vsel %vm322, %v794, 0
        %v1175 = vsel %vm322, %v809, 0
        %v1178 = vsel %vm322, %v824, 0
        %v1181 = vsel %vm322, %v839, 0
        %v1184 = vsel %vm322, %v854, 0
        %v1187 = vsel %vm322, %v869, 0
        %v1190 = vsel %vm322, %v884, 0
        %v1193 = vsel %vm322, %v899, 0
        %v1196 = vsel %vm322, %v914, 0
        %v1199 = vsel %vm322, %v929, 0
        %v1202 = vsel %vm322, %v944, 0
        %v1205 = vsel %vm322, %v959, 0
        %v1208 = vsel %vm322, %v974, 0
        %v1211 = vsel %vm322, %v989, 0
        %v1214 = vsel %vm322, %v1004, 0
        %v1217 = vsel %vm322, %v1019, 0
        %v1220 = vsel %vm322, %v1034, 0
        %v1223 = vsel %vm322, %v1049, 0
        %v1226 = vsel %vm322, %v1064, 0
        %v1229 = vsel %vm322, %v1079, 0
        %v1232 = vsel %vm322, %v1094, 0
        %v1235 = vsel %vm322, %v1109, 0
        %v1238 = vsel %vm322, %v1124, 0
        %v1241 = vsel %vm322, %v1139, 0
        %1243 = vmatpush.msra.mxu0 0.0
        %1244 = vmatpush.msra.mxu0 0.0
        %1245 = vmatpush.msra.mxu0 0.0
        %1246 = vmatpush.msra.mxu0 0.0
        %1247 = vmatpush.msra.mxu0 0.0
        %1248 = vmatpush.msra.mxu0 0.0
        %1249 = vmatpush.msra.mxu0 0.0
        %1250 = vmatpush.msra.mxu0 0.0
        %1251 = vmatpush.msra.mxu0 0.0
        %1252 = vmatpush.msra.mxu0 0.0
        %1253 = vmatpush.msra.mxu0 0.0
        %1254 = vmatpush.msra.mxu0 0.0
        %1255 = vmatpush.msra.mxu0 %v1143
        %1256 = vmatpush.msra.mxu0 %v1142
        %1257 = vmatpush.msra.mxu0 %v1141
        %1258 = vmatpush.msra.mxu0 %v1140
        %1259 = vmatmul.f32.gmra.mxu0 %v1148
        %v1260 = vpop.f32.mrf.mxu0
        %v1261 = vadd.f32 %v1145, %v1260
        %1262 = vmatmul.f32.gmra.mxu0 %v1151
        %v1263 = vpop.f32.mrf.mxu0
        %v1264 = vadd.f32 %v1145, %v1263
        %1265 = vmatmul.f32.gmra.mxu0 %v1154
        %v1266 = vpop.f32.mrf.mxu0
        %v1267 = vadd.f32 %v1145, %v1266
        %1268 = vmatmul.f32.gmra.mxu0 %v1157
        %v1269 = vpop.f32.mrf.mxu0
        %v1270 = vadd.f32 %v1145, %v1269
        %1271 = vmatmul.f32.gmra.mxu0 %v1160
        %v1272 = vpop.f32.mrf.mxu0
        %v1273 = vadd.f32 %v1145, %v1272
        %1274 = vmatmul.f32.gmra.mxu0 %v1163
        %v1275 = vpop.f32.mrf.mxu0
        %v1276 = vadd.f32 %v1145, %v1275
        %1277 = vmatmul.f32.gmra.mxu0 %v1166
        %v1278 = vpop.f32.mrf.mxu0
        %v1279 = vadd.f32 %v1145, %v1278
        %1280 = vmatmul.f32.gmra.mxu0 %v1169
        %v1281 = vpop.f32.mrf.mxu0
        %v1282 = vadd.f32 %v1145, %v1281
        %1283 = vmatmul.f32.gmra.mxu0 %v1172
        %v1284 = vpop.f32.mrf.mxu0
        %v1285 = vadd.f32 %v1145, %v1284
        %1286 = vmatmul.f32.gmra.mxu0 %v1175
        %v1287 = vpop.f32.mrf.mxu0
        %v1288 = vadd.f32 %v1145, %v1287
        %1289 = vmatmul.f32.gmra.mxu0 %v1178
        %v1290 = vpop.f32.mrf.mxu0
        %v1291 = vadd.f32 %v1145, %v1290
        %1292 = vmatmul.f32.gmra.mxu0 %v1181
        %v1293 = vpop.f32.mrf.mxu0
        %v1294 = vadd.f32 %v1145, %v1293
        %1295 = vmatmul.f32.gmra.mxu0 %v1184
        %v1296 = vpop.f32.mrf.mxu0
        %v1297 = vadd.f32 %v1145, %v1296
        %1298 = vmatmul.f32.gmra.mxu0 %v1187
        %v1299 = vpop.f32.mrf.mxu0
        %v1300 = vadd.f32 %v1145, %v1299
        %1301 = vmatmul.f32.gmra.mxu0 %v1190
        %v1302 = vpop.f32.mrf.mxu0
        %v1303 = vadd.f32 %v1145, %v1302
        %1304 = vmatmul.f32.gmra.mxu0 %v1193
        %v1305 = vpop.f32.mrf.mxu0
        %v1306 = vadd.f32 %v1145, %v1305
        %1307 = vmatmul.f32.gmra.mxu0 %v1196
        %v1308 = vpop.f32.mrf.mxu0
        %v1309 = vadd.f32 %v1145, %v1308
        %1310 = vmatmul.f32.gmra.mxu0 %v1199
        %v1311 = vpop.f32.mrf.mxu0
        %v1312 = vadd.f32 %v1145, %v1311
        %1313 = vmatmul.f32.gmra.mxu0 %v1202
        %v1314 = vpop.f32.mrf.mxu0
        %v1315 = vadd.f32 %v1145, %v1314
        %1316 = vmatmul.f32.gmra.mxu0 %v1205
        %v1317 = vpop.f32.mrf.mxu0
        %v1318 = vadd.f32 %v1145, %v1317
        %1319 = vmatmul.f32.gmra.mxu0 %v1208
        %v1320 = vpop.f32.mrf.mxu0
        %v1321 = vadd.f32 %v1145, %v1320
        %1322 = vmatmul.f32.gmra.mxu0 %v1211
        %v1323 = vpop.f32.mrf.mxu0
        %v1324 = vadd.f32 %v1145, %v1323
        %1325 = vmatmul.f32.gmra.mxu0 %v1214
        %v1326 = vpop.f32.mrf.mxu0
        %v1327 = vadd.f32 %v1145, %v1326
        %1328 = vmatmul.f32.gmra.mxu0 %v1217
        %v1329 = vpop.f32.mrf.mxu0
        %v1330 = vadd.f32 %v1145, %v1329
        %1331 = vmatmul.f32.gmra.mxu0 %v1220
        %v1332 = vpop.f32.mrf.mxu0
        %v1333 = vadd.f32 %v1145, %v1332
        %1334 = vmatmul.f32.gmra.mxu0 %v1223
        %v1335 = vpop.f32.mrf.mxu0
        %v1336 = vadd.f32 %v1145, %v1335
        %1337 = vmatmul.f32.gmra.mxu0 %v1226
        %v1338 = vpop.f32.mrf.mxu0
        %v1339 = vadd.f32 %v1145, %v1338
        %1340 = vmatmul.f32.gmra.mxu0 %v1229
        %v1341 = vpop.f32.mrf.mxu0
        %v1342 = vadd.f32 %v1145, %v1341
        %1343 = vmatmul.f32.gmra.mxu0 %v1232
        %v1344 = vpop.f32.mrf.mxu0
        %v1345 = vadd.f32 %v1145, %v1344
        %1346 = vmatmul.f32.gmra.mxu0 %v1235
        %v1347 = vpop.f32.mrf.mxu0
        %v1348 = vadd.f32 %v1145, %v1347
        %1349 = vmatmul.f32.gmra.mxu0 %v1238
        %v1350 = vpop.f32.mrf.mxu0
        %v1351 = vadd.f32 %v1145, %v1350
        %1352 = vmatmul.f32.gmra.mxu0 %v1241
        %v1353 = vpop.f32.mrf.mxu0
        %v1354 = vadd.f32 %v1145, %v1353
        %1355 = vdwg.mxu0
        %v1356 = vtanh.pop %v1261
        %v1357 = vtanh.pop %v1264
        %v1358 = vtanh.pop %v1267
        %v1359 = vtanh.pop %v1270
        %v1360 = vtanh.pop %v1273
        %v1361 = vtanh.pop %v1276
        %v1362 = vtanh.pop %v1279
        %v1363 = vtanh.pop %v1282
        %v1364 = vtanh.pop %v1285
        %v1365 = vtanh.pop %v1288
        %v1366 = vtanh.pop %v1291
        %v1367 = vtanh.pop %v1294
        %v1368 = vtanh.pop %v1297
        %v1369 = vtanh.pop %v1300
        %v1370 = vtanh.pop %v1303
        %v1371 = vtanh.pop %v1306
        %v1372 = vtanh.pop %v1309
        %v1373 = vtanh.pop %v1312
        %v1374 = vtanh.pop %v1315
        %v1375 = vtanh.pop %v1318
        %v1376 = vtanh.pop %v1321
        %v1377 = vtanh.pop %v1324
        %v1378 = vtanh.pop %v1327
        %v1379 = vtanh.pop %v1330
        %v1380 = vtanh.pop %v1333
        %v1381 = vtanh.pop %v1336
        %v1382 = vtanh.pop %v1339
        %v1383 = vtanh.pop %v1342
        %v1384 = vtanh.pop %v1345
        %v1385 = vtanh.pop %v1348
        %v1386 = vtanh.pop %v1351
        %v1387 = vtanh.pop %v1354
        %v1388 = vld [vmem:[%s5] sm:$0xff]
        %v1389 = vld [vmem:[%s5 + $0x8] sm:$0xff]
        %v1391 = vperm.slane %v314, 0
        %vm1393 = vcmask 130048
        %v1395 = vsel %vm1393, %v1356, 0
        %v1398 = vsel %vm1393, %v1357, 0
        %v1401 = vsel %vm1393, %v1358, 0
        %v1404 = vsel %vm1393, %v1359, 0
        %v1407 = vsel %vm1393, %v1360, 0
        %v1410 = vsel %vm1393, %v1361, 0
        %v1413 = vsel %vm1393, %v1362, 0
        %v1416 = vsel %vm1393, %v1363, 0
        %v1419 = vsel %vm1393, %v1364, 0
        %v1422 = vsel %vm1393, %v1365, 0
        %v1425 = vsel %vm1393, %v1366, 0
        %v1428 = vsel %vm1393, %v1367, 0
        %v1431 = vsel %vm1393, %v1368, 0
        %v1434 = vsel %vm1393, %v1369, 0
        %v1437 = vsel %vm1393, %v1370, 0
        %v1440 = vsel %vm1393, %v1371, 0
        %v1443 = vsel %vm1393, %v1372, 0
        %v1446 = vsel %vm1393, %v1373, 0
        %v1449 = vsel %vm1393, %v1374, 0
        %v1452 = vsel %vm1393, %v1375, 0
        %v1455 = vsel %vm1393, %v1376, 0
        %v1458 = vsel %vm1393, %v1377, 0
        %v1461 = vsel %vm1393, %v1378, 0
        %v1464 = vsel %vm1393, %v1379, 0
        %v1467 = vsel %vm1393, %v1380, 0
        %v1470 = vsel %vm1393, %v1381, 0
        %v1473 = vsel %vm1393, %v1382, 0
        %v1476 = vsel %vm1393, %v1383, 0
        %v1479 = vsel %vm1393, %v1384, 0
        %v1482 = vsel %vm1393, %v1385, 0
        %v1485 = vsel %vm1393, %v1386, 0
        %v1488 = vsel %vm1393, %v1387, 0
        %1490 = vmatpush.msra.mxu0 0.0
        %1491 = vmatpush.msra.mxu0 0.0
        %1492 = vmatpush.msra.mxu0 0.0
        %1493 = vmatpush.msra.mxu0 0.0
        %1494 = vmatpush.msra.mxu0 0.0
        %1495 = vmatpush.msra.mxu0 0.0
        %1496 = vmatpush.msra.mxu0 0.0
        %1497 = vmatpush.msra.mxu0 0.0
        %1498 = vmatpush.msra.mxu0 0.0
        %1499 = vmatpush.msra.mxu0 0.0
        %1500 = vmatpush.msra.mxu0 0.0
        %1501 = vmatpush.msra.mxu0 0.0
        %1502 = vmatpush.msra.mxu0 0.0
        %1503 = vmatpush.msra.mxu0 0.0
        %1504 = vmatpush.msra.mxu0 %v1389
        %1505 = vmatpush.msra.mxu0 %v1388
        %1506 = vmatmul.f32.gmra.mxu0 %v1395
        %v1507 = vpop.f32.mrf.mxu0
        %v1508 = vadd.f32 %v1391, %v1507
        %1509 = vmatmul.f32.gmra.mxu0 %v1398
        %v1510 = vpop.f32.mrf.mxu0
        %v1511 = vadd.f32 %v1391, %v1510
        %1512 = vmatmul.f32.gmra.mxu0 %v1401
        %v1513 = vpop.f32.mrf.mxu0
        %v1514 = vadd.f32 %v1391, %v1513
        %1515 = vmatmul.f32.gmra.mxu0 %v1404
        %v1516 = vpop.f32.mrf.mxu0
        %v1517 = vadd.f32 %v1391, %v1516
        %1518 = vmatmul.f32.gmra.mxu0 %v1407
        %v1519 = vpop.f32.mrf.mxu0
        %v1520 = vadd.f32 %v1391, %v1519
        %1521 = vmatmul.f32.gmra.mxu0 %v1410
        %v1522 = vpop.f32.mrf.mxu0
        %v1523 = vadd.f32 %v1391, %v1522
        %1524 = vmatmul.f32.gmra.mxu0 %v1413
        %v1525 = vpop.f32.mrf.mxu0
        %v1526 = vadd.f32 %v1391, %v1525
        %1527 = vmatmul.f32.gmra.mxu0 %v1416
        %v1528 = vpop.f32.mrf.mxu0
        %v1529 = vadd.f32 %v1391, %v1528
        %1530 = vmatmul.f32.gmra.mxu0 %v1419
        %v1531 = vpop.f32.mrf.mxu0
        %v1532 = vadd.f32 %v1391, %v1531
        %1533 = vmatmul.f32.gmra.mxu0 %v1422
        %v1534 = vpop.f32.mrf.mxu0
        %v1535 = vadd.f32 %v1391, %v1534
        %1536 = vmatmul.f32.gmra.mxu0 %v1425
        %v1537 = vpop.f32.mrf.mxu0
        %v1538 = vadd.f32 %v1391, %v1537
        %1539 = vmatmul.f32.gmra.mxu0 %v1428
        %v1540 = vpop.f32.mrf.mxu0
        %v1541 = vadd.f32 %v1391, %v1540
        %1542 = vmatmul.f32.gmra.mxu0 %v1431
        %v1543 = vpop.f32.mrf.mxu0
        %v1544 = vadd.f32 %v1391, %v1543
        %1545 = vmatmul.f32.gmra.mxu0 %v1434
        %v1546 = vpop.f32.mrf.mxu0
        %v1547 = vadd.f32 %v1391, %v1546
        %1548 = vmatmul.f32.gmra.mxu0 %v1437
        %v1549 = vpop.f32.mrf.mxu0
        %v1550 = vadd.f32 %v1391, %v1549
        %1551 = vmatmul.f32.gmra.mxu0 %v1440
        %v1552 = vpop.f32.mrf.mxu0
        %v1553 = vadd.f32 %v1391, %v1552
        %1554 = vmatmul.f32.gmra.mxu0 %v1443
        %v1555 = vpop.f32.mrf.mxu0
        %v1556 = vadd.f32 %v1391, %v1555
        %1557 = vmatmul.f32.gmra.mxu0 %v1446
        %v1558 = vpop.f32.mrf.mxu0
        %v1559 = vadd.f32 %v1391, %v1558
        %1560 = vmatmul.f32.gmra.mxu0 %v1449
        %v1561 = vpop.f32.mrf.mxu0
        %v1562 = vadd.f32 %v1391, %v1561
        %1563 = vmatmul.f32.gmra.mxu0 %v1452
        %v1564 = vpop.f32.mrf.mxu0
        %v1565 = vadd.f32 %v1391, %v1564
        %1566 = vmatmul.f32.gmra.mxu0 %v1455
        %v1567 = vpop.f32.mrf.mxu0
        %v1568 = vadd.f32 %v1391, %v1567
        %1569 = vmatmul.f32.gmra.mxu0 %v1458
        %v1570 = vpop.f32.mrf.mxu0
        %v1571 = vadd.f32 %v1391, %v1570
        %1572 = vmatmul.f32.gmra.mxu0 %v1461
        %v1573 = vpop.f32.mrf.mxu0
        %v1574 = vadd.f32 %v1391, %v1573
        %1575 = vmatmul.f32.gmra.mxu0 %v1464
        %v1576 = vpop.f32.mrf.mxu0
        %v1577 = vadd.f32 %v1391, %v1576
        %1578 = vmatmul.f32.gmra.mxu0 %v1467
        %v1579 = vpop.f32.mrf.mxu0
        %v1580 = vadd.f32 %v1391, %v1579
        %1581 = vmatmul.f32.gmra.mxu0 %v1470
        %v1582 = vpop.f32.mrf.mxu0
        %v1583 = vadd.f32 %v1391, %v1582
        %1584 = vmatmul.f32.gmra.mxu0 %v1473
        %v1585 = vpop.f32.mrf.mxu0
        %v1586 = vadd.f32 %v1391, %v1585
        %1587 = vmatmul.f32.gmra.mxu0 %v1476
        %v1588 = vpop.f32.mrf.mxu0
        %v1589 = vadd.f32 %v1391, %v1588
        %1590 = vmatmul.f32.gmra.mxu0 %v1479
        %v1591 = vpop.f32.mrf.mxu0
        %v1592 = vadd.f32 %v1391, %v1591
        %1593 = vmatmul.f32.gmra.mxu0 %v1482
        %v1594 = vpop.f32.mrf.mxu0
        %v1595 = vadd.f32 %v1391, %v1594
        %1596 = vmatmul.f32.gmra.mxu0 %v1485
        %v1597 = vpop.f32.mrf.mxu0
        %v1598 = vadd.f32 %v1391, %v1597
        %1599 = vmatmul.f32.gmra.mxu0 %v1488
        %v1600 = vpop.f32.mrf.mxu0
        %v1601 = vadd.f32 %v1391, %v1600
        %1602 = vdwg.mxu0
        %1603 = vmax.xlane.f32.xlu0 %v1508
        %v1604 = vpop.xlane.xlu0 %1603
        %1605 = vmax.xlane.f32.xlu0 %v1511
        %v1606 = vpop.xlane.xlu0 %1605
        %1607 = vmax.xlane.f32.xlu0 %v1514
        %v1608 = vpop.xlane.xlu0 %1607
        %1609 = vmax.xlane.f32.xlu0 %v1517
        %v1610 = vpop.xlane.xlu0 %1609
        %1611 = vmax.xlane.f32.xlu0 %v1520
        %v1612 = vpop.xlane.xlu0 %1611
        %1613 = vmax.xlane.f32.xlu0 %v1523
        %v1614 = vpop.xlane.xlu0 %1613
        %1615 = vmax.xlane.f32.xlu0 %v1526
        %v1616 = vpop.xlane.xlu0 %1615
        %1617 = vmax.xlane.f32.xlu0 %v1529
        %v1618 = vpop.xlane.xlu0 %1617
        %1619 = vmax.xlane.f32.xlu0 %v1532
        %v1620 = vpop.xlane.xlu0 %1619
        %1621 = vmax.xlane.f32.xlu0 %v1535
        %v1622 = vpop.xlane.xlu0 %1621
        %1623 = vmax.xlane.f32.xlu0 %v1538
        %v1624 = vpop.xlane.xlu0 %1623
        %1625 = vmax.xlane.f32.xlu0 %v1541
        %v1626 = vpop.xlane.xlu0 %1625
        %1627 = vmax.xlane.f32.xlu0 %v1544
        %v1628 = vpop.xlane.xlu0 %1627
        %1629 = vmax.xlane.f32.xlu0 %v1547
        %v1630 = vpop.xlane.xlu0 %1629
        %1631 = vmax.xlane.f32.xlu0 %v1550
        %v1632 = vpop.xlane.xlu0 %1631
        %1633 = vmax.xlane.f32.xlu0 %v1553
        %v1634 = vpop.xlane.xlu0 %1633
        %1635 = vmax.xlane.f32.xlu0 %v1556
        %v1636 = vpop.xlane.xlu0 %1635
        %1637 = vmax.xlane.f32.xlu0 %v1559
        %v1638 = vpop.xlane.xlu0 %1637
        %1639 = vmax.xlane.f32.xlu0 %v1562
        %v1640 = vpop.xlane.xlu0 %1639
        %1641 = vmax.xlane.f32.xlu0 %v1565
        %v1642 = vpop.xlane.xlu0 %1641
        %1643 = vmax.xlane.f32.xlu0 %v1568
        %v1644 = vpop.xlane.xlu0 %1643
        %1645 = vmax.xlane.f32.xlu0 %v1571
        %v1646 = vpop.xlane.xlu0 %1645
        %1647 = vmax.xlane.f32.xlu0 %v1574
        %v1648 = vpop.xlane.xlu0 %1647
        %1649 = vmax.xlane.f32.xlu0 %v1577
        %v1650 = vpop.xlane.xlu0 %1649
        %1651 = vmax.xlane.f32.xlu0 %v1580
        %v1652 = vpop.xlane.xlu0 %1651
        %1653 = vmax.xlane.f32.xlu0 %v1583
        %v1654 = vpop.xlane.xlu0 %1653
        %1655 = vmax.xlane.f32.xlu0 %v1586
        %v1656 = vpop.xlane.xlu0 %1655
        %1657 = vmax.xlane.f32.xlu0 %v1589
        %v1658 = vpop.xlane.xlu0 %1657
        %1659 = vmax.xlane.f32.xlu0 %v1592
        %v1660 = vpop.xlane.xlu0 %1659
        %1661 = vmax.xlane.f32.xlu0 %v1595
        %v1662 = vpop.xlane.xlu0 %1661
        %1663 = vmax.xlane.f32.xlu0 %v1598
        %v1664 = vpop.xlane.xlu0 %1663
        %1665 = vmax.xlane.f32.xlu0 %v1601
        %v1666 = vpop.xlane.xlu0 %1665
        %v1667 = vsub.f32 %v1508, %v1604
        %v1668 = vsub.f32 %v1511, %v1606
        %v1669 = vsub.f32 %v1514, %v1608
        %v1670 = vsub.f32 %v1517, %v1610
        %v1671 = vsub.f32 %v1520, %v1612
        %v1672 = vsub.f32 %v1523, %v1614
        %v1673 = vsub.f32 %v1526, %v1616
        %v1674 = vsub.f32 %v1529, %v1618
        %v1675 = vsub.f32 %v1532, %v1620
        %v1676 = vsub.f32 %v1535, %v1622
        %v1677 = vsub.f32 %v1538, %v1624
        %v1678 = vsub.f32 %v1541, %v1626
        %v1679 = vsub.f32 %v1544, %v1628
        %v1680 = vsub.f32 %v1547, %v1630
        %v1681 = vsub.f32 %v1550, %v1632
        %v1682 = vsub.f32 %v1553, %v1634
        %v1683 = vsub.f32 %v1556, %v1636
        %v1684 = vsub.f32 %v1559, %v1638
        %v1685 = vsub.f32 %v1562, %v1640
        %v1686 = vsub.f32 %v1565, %v1642
        %v1687 = vsub.f32 %v1568, %v1644
        %v1688 = vsub.f32 %v1571, %v1646
        %v1689 = vsub.f32 %v1574, %v1648
        %v1690 = vsub.f32 %v1577, %v1650
        %v1691 = vsub.f32 %v1580, %v1652
        %v1692 = vsub.f32 %v1583, %v1654
        %v1693 = vsub.f32 %v1586, %v1656
        %v1694 = vsub.f32 %v1589, %v1658
        %v1695 = vsub.f32 %v1592, %v1660
        %v1696 = vsub.f32 %v1595, %v1662
        %v1697 = vsub.f32 %v1598, %v1664
        %v1698 = vsub.f32 %v1601, %v1666
        %v1699 = vmul.f32 %v1667, 1.442695
        %v1700 = vpow.pop %v1699
        %v1701 = vmul.f32 %v1668, 1.442695
        %v1702 = vpow.pop %v1701
        %v1703 = vmul.f32 %v1669, 1.442695
        %v1704 = vpow.pop %v1703
        %v1705 = vmul.f32 %v1670, 1.442695
        %v1706 = vpow.pop %v1705
        %v1707 = vmul.f32 %v1671, 1.442695
        %v1708 = vpow.pop %v1707
        %v1709 = vmul.f32 %v1672, 1.442695
        %v1710 = vpow.pop %v1709
        %v1711 = vmul.f32 %v1673, 1.442695
        %v1712 = vpow.pop %v1711
        %v1713 = vmul.f32 %v1674, 1.442695
        %v1714 = vpow.pop %v1713
        %v1715 = vmul.f32 %v1675, 1.442695
        %v1716 = vpow.pop %v1715
        %v1717 = vmul.f32 %v1676, 1.442695
        %v1718 = vpow.pop %v1717
        %v1719 = vmul.f32 %v1677, 1.442695
        %v1720 = vpow.pop %v1719
        %v1721 = vmul.f32 %v1678, 1.442695
        %v1722 = vpow.pop %v1721
        %v1723 = vmul.f32 %v1679, 1.442695
        %v1724 = vpow.pop %v1723
        %v1725 = vmul.f32 %v1680, 1.442695
        %v1726 = vpow.pop %v1725
        %v1727 = vmul.f32 %v1681, 1.442695
        %v1728 = vpow.pop %v1727
        %v1729 = vmul.f32 %v1682, 1.442695
        %v1730 = vpow.pop %v1729
        %v1731 = vmul.f32 %v1683, 1.442695
        %v1732 = vpow.pop %v1731
        %v1733 = vmul.f32 %v1684, 1.442695
        %v1734 = vpow.pop %v1733
        %v1735 = vmul.f32 %v1685, 1.442695
        %v1736 = vpow.pop %v1735
        %v1737 = vmul.f32 %v1686, 1.442695
        %v1738 = vpow.pop %v1737
        %v1739 = vmul.f32 %v1687, 1.442695
        %v1740 = vpow.pop %v1739
        %v1741 = vmul.f32 %v1688, 1.442695
        %v1742 = vpow.pop %v1741
        %v1743 = vmul.f32 %v1689, 1.442695
        %v1744 = vpow.pop %v1743
        %v1745 = vmul.f32 %v1690, 1.442695
        %v1746 = vpow.pop %v1745
        %v1747 = vmul.f32 %v1691, 1.442695
        %v1748 = vpow.pop %v1747
        %v1749 = vmul.f32 %v1692, 1.442695
        %v1750 = vpow.pop %v1749
        %v1751 = vmul.f32 %v1693, 1.442695
        %v1752 = vpow.pop %v1751
        %v1753 = vmul.f32 %v1694, 1.442695
        %v1754 = vpow.pop %v1753
        %v1755 = vmul.f32 %v1695, 1.442695
        %v1756 = vpow.pop %v1755
        %v1757 = vmul.f32 %v1696, 1.442695
        %v1758 = vpow.pop %v1757
        %v1759 = vmul.f32 %v1697, 1.442695
        %v1760 = vpow.pop %v1759
        %v1761 = vmul.f32 %v1698, 1.442695
        %v1762 = vpow.pop %v1761
        %1763 = vadd.xlane.f32.xlu0 %v1700
        %v1764 = vpop.xlane.xlu0 %1763
        %1765 = vadd.xlane.f32.xlu0 %v1702
        %v1766 = vpop.xlane.xlu0 %1765
        %1767 = vadd.xlane.f32.xlu0 %v1704
        %v1768 = vpop.xlane.xlu0 %1767
        %1769 = vadd.xlane.f32.xlu0 %v1706
        %v1770 = vpop.xlane.xlu0 %1769
        %1771 = vadd.xlane.f32.xlu0 %v1708
        %v1772 = vpop.xlane.xlu0 %1771
        %1773 = vadd.xlane.f32.xlu0 %v1710
        %v1774 = vpop.xlane.xlu0 %1773
        %1775 = vadd.xlane.f32.xlu0 %v1712
        %v1776 = vpop.xlane.xlu0 %1775
        %1777 = vadd.xlane.f32.xlu0 %v1714
        %v1778 = vpop.xlane.xlu0 %1777
        %1779 = vadd.xlane.f32.xlu0 %v1716
        %v1780 = vpop.xlane.xlu0 %1779
        %1781 = vadd.xlane.f32.xlu0 %v1718
        %v1782 = vpop.xlane.xlu0 %1781
        %1783 = vadd.xlane.f32.xlu0 %v1720
        %v1784 = vpop.xlane.xlu0 %1783
        %1785 = vadd.xlane.f32.xlu0 %v1722
        %v1786 = vpop.xlane.xlu0 %1785
        %1787 = vadd.xlane.f32.xlu0 %v1724
        %v1788 = vpop.xlane.xlu0 %1787
        %1789 = vadd.xlane.f32.xlu0 %v1726
        %v1790 = vpop.xlane.xlu0 %1789
        %1791 = vadd.xlane.f32.xlu0 %v1728
        %v1792 = vpop.xlane.xlu0 %1791
        %1793 = vadd.xlane.f32.xlu0 %v1730
        %v1794 = vpop.xlane.xlu0 %1793
        %1795 = vadd.xlane.f32.xlu0 %v1732
        %v1796 = vpop.xlane.xlu0 %1795
        %1797 = vadd.xlane.f32.xlu0 %v1734
        %v1798 = vpop.xlane.xlu0 %1797
        %1799 = vadd.xlane.f32.xlu0 %v1736
        %v1800 = vpop.xlane.xlu0 %1799
        %1801 = vadd.xlane.f32.xlu0 %v1738
        %v1802 = vpop.xlane.xlu0 %1801
        %1803 = vadd.xlane.f32.xlu0 %v1740
        %v1804 = vpop.xlane.xlu0 %1803
        %1805 = vadd.xlane.f32.xlu0 %v1742
        %v1806 = vpop.xlane.xlu0 %1805
        %1807 = vadd.xlane.f32.xlu0 %v1744
        %v1808 = vpop.xlane.xlu0 %1807
        %1809 = vadd.xlane.f32.xlu0 %v1746
        %v1810 = vpop.xlane.xlu0 %1809
        %1811 = vadd.xlane.f32.xlu0 %v1748
        %v1812 = vpop.xlane.xlu0 %1811
        %1813 = vadd.xlane.f32.xlu0 %v1750
        %v1814 = vpop.xlane.xlu0 %1813
        %1815 = vadd.xlane.f32.xlu0 %v1752
        %v1816 = vpop.xlane.xlu0 %1815
        %1817 = vadd.xlane.f32.xlu0 %v1754
        %v1818 = vpop.xlane.xlu0 %1817
        %1819 = vadd.xlane.f32.xlu0 %v1756
        %v1820 = vpop.xlane.xlu0 %1819
        %1821 = vadd.xlane.f32.xlu0 %v1758
        %v1822 = vpop.xlane.xlu0 %1821
        %1823 = vadd.xlane.f32.xlu0 %v1760
        %v1824 = vpop.xlane.xlu0 %1823
        %1825 = vadd.xlane.f32.xlu0 %v1762
        %v1826 = vpop.xlane.xlu0 %1825
        %v1827 = vrcp.pop %v1764
        %v1828 = vrcp.pop %v1766
        %v1829 = vrcp.pop %v1768
        %v1830 = vrcp.pop %v1770
        %v1831 = vrcp.pop %v1772
        %v1832 = vrcp.pop %v1774
        %v1833 = vrcp.pop %v1776
        %v1834 = vrcp.pop %v1778
        %v1835 = vrcp.pop %v1780
        %v1836 = vrcp.pop %v1782
        %v1837 = vrcp.pop %v1784
        %v1838 = vrcp.pop %v1786
        %v1839 = vrcp.pop %v1788
        %v1840 = vrcp.pop %v1790
        %v1841 = vrcp.pop %v1792
        %v1842 = vrcp.pop %v1794
        %v1843 = vrcp.pop %v1796
        %v1844 = vrcp.pop %v1798
        %v1845 = vrcp.pop %v1800
        %v1846 = vrcp.pop %v1802
        %v1847 = vrcp.pop %v1804
        %v1848 = vrcp.pop %v1806
        %v1849 = vrcp.pop %v1808
        %v1850 = vrcp.pop %v1810
        %v1851 = vrcp.pop %v1812
        %v1852 = vrcp.pop %v1814
        %v1853 = vrcp.pop %v1816
        %v1854 = vrcp.pop %v1818
        %v1855 = vrcp.pop %v1820
        %v1856 = vrcp.pop %v1822
        %v1857 = vrcp.pop %v1824
        %v1858 = vrcp.pop %v1826
        %v1859 = vmul.f32 %v1700, %v1827
        %v1860 = vmul.f32 %v1702, %v1828
        %v1861 = vmul.f32 %v1704, %v1829
        %v1862 = vmul.f32 %v1706, %v1830
        %v1863 = vmul.f32 %v1708, %v1831
        %v1864 = vmul.f32 %v1710, %v1832
        %v1865 = vmul.f32 %v1712, %v1833
        %v1866 = vmul.f32 %v1714, %v1834
        %v1867 = vmul.f32 %v1716, %v1835
        %v1868 = vmul.f32 %v1718, %v1836
        %v1869 = vmul.f32 %v1720, %v1837
        %v1870 = vmul.f32 %v1722, %v1838
        %v1871 = vmul.f32 %v1724, %v1839
        %v1872 = vmul.f32 %v1726, %v1840
        %v1873 = vmul.f32 %v1728, %v1841
        %v1874 = vmul.f32 %v1730, %v1842
        %v1875 = vmul.f32 %v1732, %v1843
        %v1876 = vmul.f32 %v1734, %v1844
        %v1877 = vmul.f32 %v1736, %v1845
        %v1878 = vmul.f32 %v1738, %v1846
        %v1879 = vmul.f32 %v1740, %v1847
        %v1880 = vmul.f32 %v1742, %v1848
        %v1881 = vmul.f32 %v1744, %v1849
        %v1882 = vmul.f32 %v1746, %v1850
        %v1883 = vmul.f32 %v1748, %v1851
        %v1884 = vmul.f32 %v1750, %v1852
        %v1885 = vmul.f32 %v1752, %v1853
        %v1886 = vmul.f32 %v1754, %v1854
        %v1887 = vmul.f32 %v1756, %v1855
        %v1888 = vmul.f32 %v1758, %v1856
        %v1889 = vmul.f32 %v1760, %v1857
        %v1890 = vmul.f32 %v1762, %v1858
        %1891 = vst [vmem:[%s272] sm:$0xff] %v1859
        %1892 = vst [vmem:[%s272 + $0x8] sm:$0xff] %v1860
        %1893 = vst [vmem:[%s272 + $0x10] sm:$0xff] %v1861
        %1894 = vst [vmem:[%s272 + $0x18] sm:$0xff] %v1862
        %1895 = vst [vmem:[%s272 + $0x20] sm:$0xff] %v1863
        %1896 = vst [vmem:[%s272 + $0x28] sm:$0xff] %v1864
        %1897 = vst [vmem:[%s272 + $0x30] sm:$0xff] %v1865
        %1898 = vst [vmem:[%s272 + $0x38] sm:$0xff] %v1866
        %1899 = vst [vmem:[%s272 + $0x40] sm:$0xff] %v1867
        %1900 = vst [vmem:[%s272 + $0x48] sm:$0xff] %v1868
        %1901 = vst [vmem:[%s272 + $0x50] sm:$0xff] %v1869
        %1902 = vst [vmem:[%s272 + $0x58] sm:$0xff] %v1870
        %1903 = vst [vmem:[%s272 + $0x60] sm:$0xff] %v1871
        %1904 = vst [vmem:[%s272 + $0x68] sm:$0xff] %v1872
        %1905 = vst [vmem:[%s272 + $0x70] sm:$0xff] %v1873
        %1906 = vst [vmem:[%s272 + $0x78] sm:$0xff] %v1874
        %1907 = vst [vmem:[%s272 + $0x80] sm:$0xff] %v1875
        %1908 = vst [vmem:[%s272 + $0x88] sm:$0xff] %v1876
        %1909 = vst [vmem:[%s272 + $0x90] sm:$0xff] %v1877
        %1910 = vst [vmem:[%s272 + $0x98] sm:$0xff] %v1878
        %1911 = vst [vmem:[%s272 + $0xa0] sm:$0xff] %v1879
        %1912 = vst [vmem:[%s272 + $0xa8] sm:$0xff] %v1880
        %1913 = vst [vmem:[%s272 + $0xb0] sm:$0xff] %v1881
        %1914 = vst [vmem:[%s272 + $0xb8] sm:$0xff] %v1882
        %1915 = vst [vmem:[%s272 + $0xc0] sm:$0xff] %v1883
        %1916 = vst [vmem:[%s272 + $0xc8] sm:$0xff] %v1884
        %1917 = vst [vmem:[%s272 + $0xd0] sm:$0xff] %v1885
        %1918 = vst [vmem:[%s272 + $0xd8] sm:$0xff] %v1886
        %1919 = vst [vmem:[%s272 + $0xe0] sm:$0xff] %v1887
        %1920 = vst [vmem:[%s272 + $0xe8] sm:$0xff] %v1888
        %1921 = vst [vmem:[%s272 + $0xf0] sm:$0xff] %v1889
        %1922 = vst [vmem:[%s272 + $0xf8] sm:$0xff] %v1890
        %s1923 = sand.u32 %s181, 1
        %s1924 = scalar_lea.sflag [#allocation3], %s1923
        %s1925 = sand.u32 %s181, 1
        %s1926 = smul.addr %s1925, 256
        %s1927 = scalar_lea.vmem [#allocation2], %s1926
        // Predicated region
        $region49: #{tpu_custom_call.1} parent=47 // pred_check
          %p1928 = pneg %p191
        $region50: #{tpu_custom_call.1} parent=47 // pred_check_branch
          %1930 = sbr.rel (%p1928) target = $region52
        $region51: #{tpu_custom_call.1} parent=47 // pred_region
          %s1931 = smul.u32 32, %s21
          %1933 = vsyncadd %s1924, 0
          %s1934 = smul.addr %s1931, 8
          %s1935 = scalar_lea.hbm %s7, %s1934
          %s1936 = sshll.u32 %s1927, 4
          %s1937 = int_to_ptr.vmem [resolvable:$true] %s1936
          %s1938 = sshll.u32 %s1935, 4
          %s1939 = int_to_ptr.hbm [resolvable:$true] %s1938
          %1944 = dma.vmem_to_hbm [thread:$0]  %s1937, 4096, %s1939, %s1924, 128, 128, 8
        $region52: #{tpu_custom_call.1} parent=47 // pred_fallthru
          _
      $region48: #{tpu_custom_call.1} parent=5 // pred_fallthru
        _
      %p1945 = scmp.le.s32.totalorder 2, %s16
      // Predicated region
      $region53: #{tpu_custom_call.1} parent=5 // pred_check
        %p1946 = pneg %p1945
      $region54: #{tpu_custom_call.1} parent=5 // pred_check_branch
        %1948 = sbr.rel (%p1946) target = $region56
      $region55: #{tpu_custom_call.1} parent=5 // pred_region
        %s1949 = ssub.s32 %s16, 2
        // Predicated region
        $region57: #{tpu_custom_call.1} parent=55 // pred_check
          %p1950 = pneg %p197
        $region58: #{tpu_custom_call.1} parent=55 // pred_check_branch
          %1952 = sbr.rel (%p1950) target = $region60
        $region59: #{tpu_custom_call.1} parent=55 // pred_region
          %s1953 = sand.u32 %s182, 1
          %s1954 = scalar_lea.sflag [#allocation3], %s1953
          %s1955 = sand.u32 %s182, 1
          %s1956 = smul.addr %s1955, 256
          %s1957 = scalar_lea.vmem [#allocation2], %s1956
          %1959 = dma.done %s1954, 4096
        $region60: #{tpu_custom_call.1} parent=55 // pred_fallthru
          _
      $region56: #{tpu_custom_call.1} parent=5 // pred_fallthru
        _
    $region6: #{tpu_custom_call.1} parent=1 // loop_footer
      %s20 = sadd.s32 1, %s16
    $region7: #{tpu_custom_call.1} parent=1 // loop_footer_branch
      %15 = sbr.rel target = $region3
    $region8: #{tpu_custom_call.1} parent=1 // loop_exit
      _
    %1960 = vsyncpa [#allocation3], 1
    %s1961 = scalar_lea.sflag [#allocation3], 1
    %1962 = vsyncpa %s1961, 1

</llo_original>
